<compile_context>
chip_gen: v7x
topology: tpu7x:2x2x1
jax: 0.10.0
libtpu: 0.0.40
codegen_flags: <defaults>
</compile_context>

<pallas_src>
import functools

import jax
import jax.numpy as jnp
from jax.experimental import pallas as pl
from jax.experimental.pallas import tpu as pltpu

_BS_ITERS = 32  # threshold binary-search iterations (bottoms out at f32 ulp)


def _ssd_loss_kernel(db_ref, ploc_ref, gloc_ref, plabel_ref, glabel_ref, out_ref,
                     *, scale_xy, scale_wh):
    db = db_ref[0]            # (4, D)
    ploc = ploc_ref[...]      # (Nb, 4, D)
    gloc = gloc_ref[...]      # (Nb, 4, D)
    plab = plabel_ref[...]    # (Nb, C, D)
    glab = glabel_ref[...]    # (Nb, D) int32

    nb, c, d = plab.shape

    db_xy = db[0:2, :]        # (2, D)
    db_wh = db[2:4, :]        # (2, D)

    # ---- _loc_vec + SmoothL1Loss(reduce=False), summed over the 4 coords ----
    gxy = scale_xy * (gloc[:, 0:2, :] - db_xy) / db_wh           # (Nb, 2, D)
    gwh = scale_wh * jnp.log(gloc[:, 2:4, :] / db_wh)            # (Nb, 2, D)
    d_xy = ploc[:, 0:2, :] - gxy
    d_wh = ploc[:, 2:4, :] - gwh

    def smooth_l1(x):
        ax = jnp.abs(x)
        return jnp.where(ax < 1.0, 0.5 * x * x, ax - 0.5)

    sl1_box = (jnp.sum(smooth_l1(d_xy), axis=1)
               + jnp.sum(smooth_l1(d_wh), axis=1))                # (Nb, D)

    mask = glab > 0                                               # (Nb, D)
    mask_f = mask.astype(jnp.float32)
    pos_num = jnp.sum(mask_f, axis=1, keepdims=True)              # (Nb, 1)
    sl1_sum = jnp.sum(mask_f * sl1_box, axis=1, keepdims=True)    # (Nb, 1)

    # ---- per-box CrossEntropyLoss(reduce=False) over the class axis ----
    m = jnp.max(plab, axis=1)                                     # (Nb, D)
    lse = m + jnp.log(jnp.sum(jnp.exp(plab - m[:, None, :]), axis=1))  # (Nb, D)
    cls_iota = jax.lax.broadcasted_iota(jnp.int32, (1, c, d), 1)
    onehot = (cls_iota == glab[:, None, :]).astype(jnp.float32)   # (Nb, C, D)
    picked = jnp.sum(plab * onehot, axis=1)                       # (Nb, D)
    con = lse - picked                                            # (Nb, D)

    con_neg = jnp.where(mask, 0.0, con)
    con_neg = jnp.where(jnp.isnan(con_neg), 0.0, con_neg)         # (Nb, D), >= 0

    # ---- hard negative mining: sum of the neg_num largest con_neg values ----
    # Binary search for the neg_num-th largest value t*, then
    #   neg_sum = sum(con_neg > t*) + (neg_num - count_gt) * t*
    # which is exact under ties and reproduces the double-argsort rank
    # selection in the generic SSD regime (con > 0 on negative boxes).
    neg_num = jnp.minimum(3.0 * pos_num, float(d))                # (Nb, 1)

    lo0 = jnp.full((nb, 1), -1.0, jnp.float32)                    # below min(con_neg)=0
    hi0 = jnp.max(con_neg, axis=1, keepdims=True)                 # (Nb, 1)

    def bs_body(_, carry):
        lo, hi = carry
        mid = 0.5 * (lo + hi)
        cnt = jnp.sum((con_neg > mid).astype(jnp.float32), axis=1, keepdims=True)
        ge = cnt >= neg_num
        return jnp.where(ge, mid, lo), jnp.where(ge, hi, mid)

    _, hi = jax.lax.fori_loop(0, _BS_ITERS, bs_body, (lo0, hi0), unroll=True)

    # Exact k-th largest value: largest data value not exceeding the upper
    # bracket (hi >= t* always; bracket width is ~1 ulp after the search).
    t_star = jnp.max(jnp.where(con_neg <= hi, con_neg, -jnp.inf),
                     axis=1, keepdims=True)                       # (Nb, 1)
    gt = (con_neg > t_star).astype(jnp.float32)                   # (Nb, D)
    count_gt = jnp.sum(gt, axis=1, keepdims=True)                 # (Nb, 1)
    sum_gt = jnp.sum(con_neg * gt, axis=1, keepdims=True)         # (Nb, 1)
    neg_sum = sum_gt + (neg_num - count_gt) * t_star              # (Nb, 1)

    closs = jnp.sum(con * mask_f, axis=1, keepdims=True) + neg_sum  # (Nb, 1)

    total = sl1_sum + closs
    num_mask = (pos_num > 0.0).astype(jnp.float32)
    res = total * num_mask / jnp.maximum(pos_num, 1e-6)           # (Nb, 1)

    out_ref[...] = jnp.broadcast_to(res, out_ref.shape)           # lane-dense store


def ssd_loss(ploc, plabel, gloc, glabel, dboxes, *, scale_xy, scale_wh):
    N, _, D = ploc.shape
    C = plabel.shape[1]
    # TODO(synk): real SSD has D=8732 (not a multiple of 128); pad to 8832 with
    # glabel=0 in padded lanes and all-equal plabel logits there so con=0 and
    # the pads can never be selected as hard negatives.
    assert D % 128 == 0, "default-box axis must be a multiple of 128"

    block_n = 8 if N % 8 == 0 else N          # fill the 8-sublane dim when possible
    glabel_i = glabel.astype(jnp.int32)

    # VMEM budget: one block of every input, double-buffered, plus headroom;
    # capped at 64 MiB so the same setting is safe on v7x.
    blk_bytes = 4 * D * (4 + block_n * (4 + 4 + C + 1))
    vmem_limit = int(min(64 << 20, max(32 << 20, 3 * blk_bytes)))

    kernel = functools.partial(_ssd_loss_kernel, scale_xy=scale_xy, scale_wh=scale_wh)
    per_sample = pl.pallas_call(
        kernel,
        out_shape=jax.ShapeDtypeStruct((N, 128), jnp.float32),
        grid_spec=pltpu.PrefetchScalarGridSpec(
            num_scalar_prefetch=0,
            grid=(N // block_n,),
            in_specs=[
                pl.BlockSpec((1, 4, D), lambda n: (0, 0, 0)),        # dboxes (shared)
                pl.BlockSpec((block_n, 4, D), lambda n: (n, 0, 0)),  # ploc
                pl.BlockSpec((block_n, 4, D), lambda n: (n, 0, 0)),  # gloc
                pl.BlockSpec((block_n, C, D), lambda n: (n, 0, 0)),  # plabel
                pl.BlockSpec((block_n, D), lambda n: (n, 0)),        # glabel
            ],
            out_specs=pl.BlockSpec((block_n, 128), lambda n: (n, 0)),
        ),
        compiler_params=pltpu.CompilerParams(
            dimension_semantics=("parallel",),
            vmem_limit_bytes=vmem_limit,
        ),
    )(dboxes, ploc, gloc, plabel, glabel_i)
    return jnp.mean(per_sample[:, 0])


def ref_loss(ploc, plabel, gloc, glabel, dboxes, scale_xy, scale_wh):
    """Pure-JAX reference matching the PyTorch module."""
    D = ploc.shape[2]
    mask = glabel > 0
    mask_f = mask.astype(jnp.float32)
    pos_num = jnp.sum(mask, axis=1)
    db_xy, db_wh = dboxes[:, :2, :], dboxes[:, 2:, :]
    gxy = scale_xy * (gloc[:, :2, :] - db_xy) / db_wh
    gwh = scale_wh * jnp.log(gloc[:, 2:, :] / db_wh)
    vec_gd = jnp.concatenate([gxy, gwh], axis=1)
    d = ploc - vec_gd
    ad = jnp.abs(d)
    sl1 = jnp.where(ad < 1.0, 0.5 * d * d, ad - 0.5).sum(axis=1)
    sl1 = (mask_f * sl1).sum(axis=1)
    lse = jax.scipy.special.logsumexp(plabel, axis=1)
    picked = jnp.take_along_axis(plabel, glabel[:, None, :], axis=1)[:, 0, :]
    con = lse - picked
    con_neg = jnp.where(mask, 0.0, con)
    con_neg = jnp.where(jnp.isnan(con_neg), 0.0, con_neg)
    con_idx = jnp.argsort(-con_neg, axis=1)
    con_rank = jnp.argsort(con_idx, axis=1)
    neg_num = jnp.minimum(3 * pos_num, D)[:, None]
    neg_mask = con_rank < neg_num
    closs = (con * (mask_f + neg_mask.astype(jnp.float32))).sum(axis=1)
    total = sl1 + closs
    num_mask = (pos_num > 0).astype(jnp.float32)
    pos_f = jnp.maximum(pos_num.astype(jnp.float32), 1e-6)
    return jnp.mean(total * num_mask / pos_f)


if __name__ == "__main__":
    N, C, D = 4, 8, 256          # batch, label_num, num default boxes (stand-in for 8732)
    scale_xy = 1.0 / 0.1         # dboxes.scale_xy = 0.1 in SSD
    scale_wh = 1.0 / 0.2         # dboxes.scale_wh = 0.2 in SSD

    key = jax.random.PRNGKey(0)
    k = jax.random.split(key, 8)
    db_xy = jax.random.uniform(k[0], (1, 2, D), minval=0.05, maxval=0.95)
    db_wh = jax.random.uniform(k[1], (1, 2, D), minval=0.10, maxval=0.50)
    dboxes = jnp.concatenate([db_xy, db_wh], axis=1).astype(jnp.float32)     # (1,4,D) xywh
    ploc = (0.5 * jax.random.normal(k[2], (N, 4, D))).astype(jnp.float32)
    g_xy = jax.random.uniform(k[3], (N, 2, D), minval=0.0, maxval=1.0)
    g_wh = jax.random.uniform(k[4], (N, 2, D), minval=0.05, maxval=0.60)
    gloc = jnp.concatenate([g_xy, g_wh], axis=1).astype(jnp.float32)
    plabel = jax.random.normal(k[5], (N, C, D)).astype(jnp.float32)
    is_pos = jax.random.uniform(k[6], (N, D)) < 0.15
    pos_cls = jax.random.randint(k[7], (N, D), 1, C)
    glabel = jnp.where(is_pos, pos_cls, 0).astype(jnp.int32)                 # (N, D)

    out = ssd_loss(ploc, plabel, gloc, glabel, dboxes,
                   scale_xy=scale_xy, scale_wh=scale_wh)
    out = jax.block_until_ready(out)

    ref = ref_loss(ploc, plabel, gloc, glabel, dboxes, scale_xy, scale_wh)
    assert jnp.allclose(out, ref, rtol=2e-3, atol=1e-3), (out, ref)
    print("KERNEL_OK")
</pallas_src>

<mosaic_0001>
module attributes {stable_mosaic.version = 11 : i64} {
  func.func @_ssd_loss_kernel(%arg0: i32, %arg1: memref<1x4x256xf32, #tpu.memory_space<vmem>>, %arg2: memref<4x4x256xf32, #tpu.memory_space<vmem>>, %arg3: memref<4x4x256xf32, #tpu.memory_space<vmem>>, %arg4: memref<4x8x256xf32, #tpu.memory_space<vmem>>, %arg5: memref<4x256xi32, #tpu.memory_space<vmem>>, %arg6: memref<4x128xf32, #tpu.memory_space<vmem>>) attributes {dimension_semantics = [#tpu.dimension_semantics<parallel>], iteration_bounds = array<i64: 1>, scalar_prefetch = 0 : i64, scratch_operands = 0 : i64, tpu.core_type = #tpu.core_type<tc>, window_params = [{pipeline_mode = #tpu.pipeline_mode<synchronous>, transform_indices = @transform_0, window_bounds = array<i64: 1, 4, 256>}, {transform_indices = @transform_1, window_bounds = array<i64: 4, 4, 256>}, {transform_indices = @transform_2, window_bounds = array<i64: 4, 4, 256>}, {transform_indices = @transform_3, window_bounds = array<i64: 4, 8, 256>}, {transform_indices = @transform_4, window_bounds = array<i64: 4, 256>}, {transform_indices = @transform_5, window_bounds = array<i64: 4, 128>}]} {
    %c0 = arith.constant 0 : index
    %c0_0 = arith.constant 0 : index
    %c0_1 = arith.constant 0 : index
    %0 = vector.load %arg1[%c0, %c0_0, %c0_1] : memref<1x4x256xf32, #tpu.memory_space<vmem>>, vector<1x4x256xf32>
    %1 = vector.shape_cast %0 : vector<1x4x256xf32> to vector<4x256xf32>
    %c0_2 = arith.constant 0 : index
    %c0_3 = arith.constant 0 : index
    %c0_4 = arith.constant 0 : index
    %2 = vector.load %arg2[%c0_2, %c0_3, %c0_4] : memref<4x4x256xf32, #tpu.memory_space<vmem>>, vector<4x4x256xf32>
    %c0_5 = arith.constant 0 : index
    %c0_6 = arith.constant 0 : index
    %c0_7 = arith.constant 0 : index
    %3 = vector.load %arg3[%c0_5, %c0_6, %c0_7] : memref<4x4x256xf32, #tpu.memory_space<vmem>>, vector<4x4x256xf32>
    %c0_8 = arith.constant 0 : index
    %c0_9 = arith.constant 0 : index
    %c0_10 = arith.constant 0 : index
    %4 = vector.load %arg4[%c0_8, %c0_9, %c0_10] : memref<4x8x256xf32, #tpu.memory_space<vmem>>, vector<4x8x256xf32>
    %c0_11 = arith.constant 0 : index
    %c0_12 = arith.constant 0 : index
    %5 = vector.load %arg5[%c0_11, %c0_12] : memref<4x256xi32, #tpu.memory_space<vmem>>, vector<4x256xi32>
    %6 = vector.extract_strided_slice %1 {offsets = [0, 0], sizes = [2, 256], strides = [1, 1]} : vector<4x256xf32> to vector<2x256xf32>
    %7 = vector.extract_strided_slice %1 {offsets = [2, 0], sizes = [2, 256], strides = [1, 1]} : vector<4x256xf32> to vector<2x256xf32>
    %8 = vector.extract_strided_slice %3 {offsets = [0, 0, 0], sizes = [4, 2, 256], strides = [1, 1, 1]} : vector<4x4x256xf32> to vector<4x2x256xf32>
    %9 = vector.shape_cast %6 : vector<2x256xf32> to vector<1x2x256xf32>
    %10 = vector.broadcast %9 : vector<1x2x256xf32> to vector<4x2x256xf32>
    %11 = arith.subf %8, %10 : vector<4x2x256xf32>
    %cst = arith.constant 1.000000e+01 : f32
    %12 = vector.broadcast %cst : f32 to vector<4x2x256xf32>
    %13 = arith.mulf %12, %11 : vector<4x2x256xf32>
    %14 = vector.shape_cast %7 : vector<2x256xf32> to vector<1x2x256xf32>
    %15 = vector.broadcast %14 : vector<1x2x256xf32> to vector<4x2x256xf32>
    %16 = arith.divf %13, %15 : vector<4x2x256xf32>
    %17 = vector.extract_strided_slice %3 {offsets = [0, 2, 0], sizes = [4, 2, 256], strides = [1, 1, 1]} : vector<4x4x256xf32> to vector<4x2x256xf32>
    %18 = vector.shape_cast %7 : vector<2x256xf32> to vector<1x2x256xf32>
    %19 = vector.broadcast %18 : vector<1x2x256xf32> to vector<4x2x256xf32>
    %20 = arith.divf %17, %19 : vector<4x2x256xf32>
    %21 = math.log %20 : vector<4x2x256xf32>
    %cst_13 = arith.constant 5.000000e+00 : f32
    %22 = vector.broadcast %cst_13 : f32 to vector<4x2x256xf32>
    %23 = arith.mulf %22, %21 : vector<4x2x256xf32>
    %24 = vector.extract_strided_slice %2 {offsets = [0, 0, 0], sizes = [4, 2, 256], strides = [1, 1, 1]} : vector<4x4x256xf32> to vector<4x2x256xf32>
    %25 = arith.subf %24, %16 : vector<4x2x256xf32>
    %26 = vector.extract_strided_slice %2 {offsets = [0, 2, 0], sizes = [4, 2, 256], strides = [1, 1, 1]} : vector<4x4x256xf32> to vector<4x2x256xf32>
    %27 = arith.subf %26, %23 : vector<4x2x256xf32>
    %28 = math.absf %25 : vector<4x2x256xf32>
    %cst_14 = arith.constant 1.000000e+00 : f32
    %29 = vector.broadcast %cst_14 : f32 to vector<4x2x256xf32>
    %30 = arith.cmpf olt, %28, %29 : vector<4x2x256xf32>
    %cst_15 = arith.constant 5.000000e-01 : f32
    %31 = vector.broadcast %cst_15 : f32 to vector<4x2x256xf32>
    %32 = arith.mulf %31, %25 : vector<4x2x256xf32>
    %33 = arith.mulf %32, %25 : vector<4x2x256xf32>
    %cst_16 = arith.constant 5.000000e-01 : f32
    %34 = vector.broadcast %cst_16 : f32 to vector<4x2x256xf32>
    %35 = arith.subf %28, %34 : vector<4x2x256xf32>
    %36 = arith.select %30, %33, %35 : vector<4x2x256xi1>, vector<4x2x256xf32>
    %cst_17 = arith.constant dense<0.000000e+00> : vector<4x256xf32>
    %37 = vector.multi_reduction <add>, %36, %cst_17 [1] : vector<4x2x256xf32> to vector<4x256xf32>
    %38 = math.absf %27 : vector<4x2x256xf32>
    %cst_18 = arith.constant 1.000000e+00 : f32
    %39 = vector.broadcast %cst_18 : f32 to vector<4x2x256xf32>
    %40 = arith.cmpf olt, %38, %39 : vector<4x2x256xf32>
    %cst_19 = arith.constant 5.000000e-01 : f32
    %41 = vector.broadcast %cst_19 : f32 to vector<4x2x256xf32>
    %42 = arith.mulf %41, %27 : vector<4x2x256xf32>
    %43 = arith.mulf %42, %27 : vector<4x2x256xf32>
    %cst_20 = arith.constant 5.000000e-01 : f32
    %44 = vector.broadcast %cst_20 : f32 to vector<4x2x256xf32>
    %45 = arith.subf %38, %44 : vector<4x2x256xf32>
    %46 = arith.select %40, %43, %45 : vector<4x2x256xi1>, vector<4x2x256xf32>
    %cst_21 = arith.constant dense<0.000000e+00> : vector<4x256xf32>
    %47 = vector.multi_reduction <add>, %46, %cst_21 [1] : vector<4x2x256xf32> to vector<4x256xf32>
    %48 = arith.addf %37, %47 : vector<4x256xf32>
    %c0_i32 = arith.constant 0 : i32
    %49 = vector.broadcast %c0_i32 : i32 to vector<4x256xi32>
    %50 = arith.cmpi sgt, %5, %49 : vector<4x256xi32>
    %51 = arith.extui %50 : vector<4x256xi1> to vector<4x256xi32>
    %52 = arith.sitofp %51 : vector<4x256xi32> to vector<4x256xf32>
    %cst_22 = arith.constant dense<0.000000e+00> : vector<4xf32>
    %53 = vector.multi_reduction <add>, %52, %cst_22 [1] : vector<4x256xf32> to vector<4xf32>
    %54 = vector.shape_cast %53 : vector<4xf32> to vector<4x1xf32>
    %55 = arith.mulf %52, %48 : vector<4x256xf32>
    %cst_23 = arith.constant dense<0.000000e+00> : vector<4xf32>
    %56 = vector.multi_reduction <add>, %55, %cst_23 [1] : vector<4x256xf32> to vector<4xf32>
    %57 = vector.shape_cast %56 : vector<4xf32> to vector<4x1xf32>
    %cst_24 = arith.constant dense<0xFF800000> : vector<4x256xf32>
    %58 = vector.multi_reduction <maximumf>, %4, %cst_24 [1] : vector<4x8x256xf32> to vector<4x256xf32>
    %59 = vector.shape_cast %58 : vector<4x256xf32> to vector<4x1x256xf32>
    %60 = vector.broadcast %59 : vector<4x1x256xf32> to vector<4x8x256xf32>
    %61 = arith.subf %4, %60 : vector<4x8x256xf32>
    %62 = math.exp %61 : vector<4x8x256xf32>
    %cst_25 = arith.constant dense<0.000000e+00> : vector<4x256xf32>
    %63 = vector.multi_reduction <add>, %62, %cst_25 [1] : vector<4x8x256xf32> to vector<4x256xf32>
    %64 = math.log %63 : vector<4x256xf32>
    %65 = arith.addf %58, %64 : vector<4x256xf32>
    %66 = tpu.iota {dimensions = array<i32: 1>} : vector<1x8x256xi32>
    %67 = vector.shape_cast %5 : vector<4x256xi32> to vector<4x1x256xi32>
    %68 = vector.broadcast %66 : vector<1x8x256xi32> to vector<4x8x256xi32>
    %69 = vector.broadcast %67 : vector<4x1x256xi32> to vector<4x8x256xi32>
    %70 = arith.cmpi eq, %68, %69 : vector<4x8x256xi32>
    %71 = arith.extui %70 : vector<4x8x256xi1> to vector<4x8x256xi32>
    %72 = arith.sitofp %71 : vector<4x8x256xi32> to vector<4x8x256xf32>
    %73 = arith.mulf %4, %72 : vector<4x8x256xf32>
    %cst_26 = arith.constant dense<0.000000e+00> : vector<4x256xf32>
    %74 = vector.multi_reduction <add>, %73, %cst_26 [1] : vector<4x8x256xf32> to vector<4x256xf32>
    %75 = arith.subf %65, %74 : vector<4x256xf32>
    %cst_27 = arith.constant 0.000000e+00 : f32
    %76 = vector.broadcast %cst_27 : f32 to vector<4x256xf32>
    %77 = arith.select %50, %76, %75 : vector<4x256xi1>, vector<4x256xf32>
    %78 = arith.cmpf one, %77, %77 : vector<4x256xf32>
    %cst_28 = arith.constant 0.000000e+00 : f32
    %79 = vector.broadcast %cst_28 : f32 to vector<4x256xf32>
    %80 = arith.select %78, %79, %77 : vector<4x256xi1>, vector<4x256xf32>
    %cst_29 = arith.constant 3.000000e+00 : f32
    %81 = vector.broadcast %cst_29 : f32 to vector<4x1xf32>
    %82 = arith.mulf %81, %54 : vector<4x1xf32>
    %cst_30 = arith.constant 2.560000e+02 : f32
    %83 = vector.broadcast %cst_30 : f32 to vector<4x1xf32>
    %84 = arith.minimumf %82, %83 : vector<4x1xf32>
    %cst_31 = arith.constant -1.000000e+00 : f32
    %85 = vector.broadcast %cst_31 : f32 to vector<4x1xf32>
    %cst_32 = arith.constant dense<0xFF800000> : vector<4xf32>
    %86 = vector.multi_reduction <maximumf>, %80, %cst_32 [1] : vector<4x256xf32> to vector<4xf32>
    %87 = vector.shape_cast %86 : vector<4xf32> to vector<4x1xf32>
    %c0_i32_33 = arith.constant 0 : i32
    %88 = arith.addf %85, %87 : vector<4x1xf32>
    %cst_34 = arith.constant 5.000000e-01 : f32
    %89 = vector.broadcast %cst_34 : f32 to vector<4x1xf32>
    %90 = arith.mulf %89, %88 : vector<4x1xf32>
    %91 = vector.broadcast %90 : vector<4x1xf32> to vector<4x256xf32>
    %92 = arith.cmpf ogt, %80, %91 : vector<4x256xf32>
    %93 = arith.extui %92 : vector<4x256xi1> to vector<4x256xi32>
    %94 = arith.sitofp %93 : vector<4x256xi32> to vector<4x256xf32>
    %cst_35 = arith.constant dense<0.000000e+00> : vector<4xf32>
    %95 = vector.multi_reduction <add>, %94, %cst_35 [1] : vector<4x256xf32> to vector<4xf32>
    %96 = vector.shape_cast %95 : vector<4xf32> to vector<4x1xf32>
    %97 = arith.cmpf oge, %96, %84 : vector<4x1xf32>
    %98 = arith.select %97, %90, %85 : vector<4x1xi1>, vector<4x1xf32>
    %99 = arith.select %97, %87, %90 : vector<4x1xi1>, vector<4x1xf32>
    %c1_i32 = arith.constant 1 : i32
    %100 = arith.addf %98, %99 : vector<4x1xf32>
    %cst_36 = arith.constant 5.000000e-01 : f32
    %101 = vector.broadcast %cst_36 : f32 to vector<4x1xf32>
    %102 = arith.mulf %101, %100 : vector<4x1xf32>
    %103 = vector.broadcast %102 : vector<4x1xf32> to vector<4x256xf32>
    %104 = arith.cmpf ogt, %80, %103 : vector<4x256xf32>
    %105 = arith.extui %104 : vector<4x256xi1> to vector<4x256xi32>
    %106 = arith.sitofp %105 : vector<4x256xi32> to vector<4x256xf32>
    %cst_37 = arith.constant dense<0.000000e+00> : vector<4xf32>
    %107 = vector.multi_reduction <add>, %106, %cst_37 [1] : vector<4x256xf32> to vector<4xf32>
    %108 = vector.shape_cast %107 : vector<4xf32> to vector<4x1xf32>
    %109 = arith.cmpf oge, %108, %84 : vector<4x1xf32>
    %110 = arith.select %109, %102, %98 : vector<4x1xi1>, vector<4x1xf32>
    %111 = arith.select %109, %99, %102 : vector<4x1xi1>, vector<4x1xf32>
    %c2_i32 = arith.constant 2 : i32
    %112 = arith.addf %110, %111 : vector<4x1xf32>
    %cst_38 = arith.constant 5.000000e-01 : f32
    %113 = vector.broadcast %cst_38 : f32 to vector<4x1xf32>
    %114 = arith.mulf %113, %112 : vector<4x1xf32>
    %115 = vector.broadcast %114 : vector<4x1xf32> to vector<4x256xf32>
    %116 = arith.cmpf ogt, %80, %115 : vector<4x256xf32>
    %117 = arith.extui %116 : vector<4x256xi1> to vector<4x256xi32>
    %118 = arith.sitofp %117 : vector<4x256xi32> to vector<4x256xf32>
    %cst_39 = arith.constant dense<0.000000e+00> : vector<4xf32>
    %119 = vector.multi_reduction <add>, %118, %cst_39 [1] : vector<4x256xf32> to vector<4xf32>
    %120 = vector.shape_cast %119 : vector<4xf32> to vector<4x1xf32>
    %121 = arith.cmpf oge, %120, %84 : vector<4x1xf32>
    %122 = arith.select %121, %114, %110 : vector<4x1xi1>, vector<4x1xf32>
    %123 = arith.select %121, %111, %114 : vector<4x1xi1>, vector<4x1xf32>
    %c3_i32 = arith.constant 3 : i32
    %124 = arith.addf %122, %123 : vector<4x1xf32>
    %cst_40 = arith.constant 5.000000e-01 : f32
    %125 = vector.broadcast %cst_40 : f32 to vector<4x1xf32>
    %126 = arith.mulf %125, %124 : vector<4x1xf32>
    %127 = vector.broadcast %126 : vector<4x1xf32> to vector<4x256xf32>
    %128 = arith.cmpf ogt, %80, %127 : vector<4x256xf32>
    %129 = arith.extui %128 : vector<4x256xi1> to vector<4x256xi32>
    %130 = arith.sitofp %129 : vector<4x256xi32> to vector<4x256xf32>
    %cst_41 = arith.constant dense<0.000000e+00> : vector<4xf32>
    %131 = vector.multi_reduction <add>, %130, %cst_41 [1] : vector<4x256xf32> to vector<4xf32>
    %132 = vector.shape_cast %131 : vector<4xf32> to vector<4x1xf32>
    %133 = arith.cmpf oge, %132, %84 : vector<4x1xf32>
    %134 = arith.select %133, %126, %122 : vector<4x1xi1>, vector<4x1xf32>
    %135 = arith.select %133, %123, %126 : vector<4x1xi1>, vector<4x1xf32>
    %c4_i32 = arith.constant 4 : i32
    %136 = arith.addf %134, %135 : vector<4x1xf32>
    %cst_42 = arith.constant 5.000000e-01 : f32
    %137 = vector.broadcast %cst_42 : f32 to vector<4x1xf32>
    %138 = arith.mulf %137, %136 : vector<4x1xf32>
    %139 = vector.broadcast %138 : vector<4x1xf32> to vector<4x256xf32>
    %140 = arith.cmpf ogt, %80, %139 : vector<4x256xf32>
    %141 = arith.extui %140 : vector<4x256xi1> to vector<4x256xi32>
    %142 = arith.sitofp %141 : vector<4x256xi32> to vector<4x256xf32>
    %cst_43 = arith.constant dense<0.000000e+00> : vector<4xf32>
    %143 = vector.multi_reduction <add>, %142, %cst_43 [1] : vector<4x256xf32> to vector<4xf32>
    %144 = vector.shape_cast %143 : vector<4xf32> to vector<4x1xf32>
    %145 = arith.cmpf oge, %144, %84 : vector<4x1xf32>
    %146 = arith.select %145, %138, %134 : vector<4x1xi1>, vector<4x1xf32>
    %147 = arith.select %145, %135, %138 : vector<4x1xi1>, vector<4x1xf32>
    %c5_i32 = arith.constant 5 : i32
    %148 = arith.addf %146, %147 : vector<4x1xf32>
    %cst_44 = arith.constant 5.000000e-01 : f32
    %149 = vector.broadcast %cst_44 : f32 to vector<4x1xf32>
    %150 = arith.mulf %149, %148 : vector<4x1xf32>
    %151 = vector.broadcast %150 : vector<4x1xf32> to vector<4x256xf32>
    %152 = arith.cmpf ogt, %80, %151 : vector<4x256xf32>
    %153 = arith.extui %152 : vector<4x256xi1> to vector<4x256xi32>
    %154 = arith.sitofp %153 : vector<4x256xi32> to vector<4x256xf32>
    %cst_45 = arith.constant dense<0.000000e+00> : vector<4xf32>
    %155 = vector.multi_reduction <add>, %154, %cst_45 [1] : vector<4x256xf32> to vector<4xf32>
    %156 = vector.shape_cast %155 : vector<4xf32> to vector<4x1xf32>
    %157 = arith.cmpf oge, %156, %84 : vector<4x1xf32>
    %158 = arith.select %157, %150, %146 : vector<4x1xi1>, vector<4x1xf32>
    %159 = arith.select %157, %147, %150 : vector<4x1xi1>, vector<4x1xf32>
    %c6_i32 = arith.constant 6 : i32
    %160 = arith.addf %158, %159 : vector<4x1xf32>
    %cst_46 = arith.constant 5.000000e-01 : f32
    %161 = vector.broadcast %cst_46 : f32 to vector<4x1xf32>
    %162 = arith.mulf %161, %160 : vector<4x1xf32>
    %163 = vector.broadcast %162 : vector<4x1xf32> to vector<4x256xf32>
    %164 = arith.cmpf ogt, %80, %163 : vector<4x256xf32>
    %165 = arith.extui %164 : vector<4x256xi1> to vector<4x256xi32>
    %166 = arith.sitofp %165 : vector<4x256xi32> to vector<4x256xf32>
    %cst_47 = arith.constant dense<0.000000e+00> : vector<4xf32>
    %167 = vector.multi_reduction <add>, %166, %cst_47 [1] : vector<4x256xf32> to vector<4xf32>
    %168 = vector.shape_cast %167 : vector<4xf32> to vector<4x1xf32>
    %169 = arith.cmpf oge, %168, %84 : vector<4x1xf32>
    %170 = arith.select %169, %162, %158 : vector<4x1xi1>, vector<4x1xf32>
    %171 = arith.select %169, %159, %162 : vector<4x1xi1>, vector<4x1xf32>
    %c7_i32 = arith.constant 7 : i32
    %172 = arith.addf %170, %171 : vector<4x1xf32>
    %cst_48 = arith.constant 5.000000e-01 : f32
    %173 = vector.broadcast %cst_48 : f32 to vector<4x1xf32>
    %174 = arith.mulf %173, %172 : vector<4x1xf32>
    %175 = vector.broadcast %174 : vector<4x1xf32> to vector<4x256xf32>
    %176 = arith.cmpf ogt, %80, %175 : vector<4x256xf32>
    %177 = arith.extui %176 : vector<4x256xi1> to vector<4x256xi32>
    %178 = arith.sitofp %177 : vector<4x256xi32> to vector<4x256xf32>
    %cst_49 = arith.constant dense<0.000000e+00> : vector<4xf32>
    %179 = vector.multi_reduction <add>, %178, %cst_49 [1] : vector<4x256xf32> to vector<4xf32>
    %180 = vector.shape_cast %179 : vector<4xf32> to vector<4x1xf32>
    %181 = arith.cmpf oge, %180, %84 : vector<4x1xf32>
    %182 = arith.select %181, %174, %170 : vector<4x1xi1>, vector<4x1xf32>
    %183 = arith.select %181, %171, %174 : vector<4x1xi1>, vector<4x1xf32>
    %c8_i32 = arith.constant 8 : i32
    %184 = arith.addf %182, %183 : vector<4x1xf32>
    %cst_50 = arith.constant 5.000000e-01 : f32
    %185 = vector.broadcast %cst_50 : f32 to vector<4x1xf32>
    %186 = arith.mulf %185, %184 : vector<4x1xf32>
    %187 = vector.broadcast %186 : vector<4x1xf32> to vector<4x256xf32>
    %188 = arith.cmpf ogt, %80, %187 : vector<4x256xf32>
    %189 = arith.extui %188 : vector<4x256xi1> to vector<4x256xi32>
    %190 = arith.sitofp %189 : vector<4x256xi32> to vector<4x256xf32>
    %cst_51 = arith.constant dense<0.000000e+00> : vector<4xf32>
    %191 = vector.multi_reduction <add>, %190, %cst_51 [1] : vector<4x256xf32> to vector<4xf32>
    %192 = vector.shape_cast %191 : vector<4xf32> to vector<4x1xf32>
    %193 = arith.cmpf oge, %192, %84 : vector<4x1xf32>
    %194 = arith.select %193, %186, %182 : vector<4x1xi1>, vector<4x1xf32>
    %195 = arith.select %193, %183, %186 : vector<4x1xi1>, vector<4x1xf32>
    %c9_i32 = arith.constant 9 : i32
    %196 = arith.addf %194, %195 : vector<4x1xf32>
    %cst_52 = arith.constant 5.000000e-01 : f32
    %197 = vector.broadcast %cst_52 : f32 to vector<4x1xf32>
    %198 = arith.mulf %197, %196 : vector<4x1xf32>
    %199 = vector.broadcast %198 : vector<4x1xf32> to vector<4x256xf32>
    %200 = arith.cmpf ogt, %80, %199 : vector<4x256xf32>
    %201 = arith.extui %200 : vector<4x256xi1> to vector<4x256xi32>
    %202 = arith.sitofp %201 : vector<4x256xi32> to vector<4x256xf32>
    %cst_53 = arith.constant dense<0.000000e+00> : vector<4xf32>
    %203 = vector.multi_reduction <add>, %202, %cst_53 [1] : vector<4x256xf32> to vector<4xf32>
    %204 = vector.shape_cast %203 : vector<4xf32> to vector<4x1xf32>
    %205 = arith.cmpf oge, %204, %84 : vector<4x1xf32>
    %206 = arith.select %205, %198, %194 : vector<4x1xi1>, vector<4x1xf32>
    %207 = arith.select %205, %195, %198 : vector<4x1xi1>, vector<4x1xf32>
    %c10_i32 = arith.constant 10 : i32
    %208 = arith.addf %206, %207 : vector<4x1xf32>
    %cst_54 = arith.constant 5.000000e-01 : f32
    %209 = vector.broadcast %cst_54 : f32 to vector<4x1xf32>
    %210 = arith.mulf %209, %208 : vector<4x1xf32>
    %211 = vector.broadcast %210 : vector<4x1xf32> to vector<4x256xf32>
    %212 = arith.cmpf ogt, %80, %211 : vector<4x256xf32>
    %213 = arith.extui %212 : vector<4x256xi1> to vector<4x256xi32>
    %214 = arith.sitofp %213 : vector<4x256xi32> to vector<4x256xf32>
    %cst_55 = arith.constant dense<0.000000e+00> : vector<4xf32>
    %215 = vector.multi_reduction <add>, %214, %cst_55 [1] : vector<4x256xf32> to vector<4xf32>
    %216 = vector.shape_cast %215 : vector<4xf32> to vector<4x1xf32>
    %217 = arith.cmpf oge, %216, %84 : vector<4x1xf32>
    %218 = arith.select %217, %210, %206 : vector<4x1xi1>, vector<4x1xf32>
    %219 = arith.select %217, %207, %210 : vector<4x1xi1>, vector<4x1xf32>
    %c11_i32 = arith.constant 11 : i32
    %220 = arith.addf %218, %219 : vector<4x1xf32>
    %cst_56 = arith.constant 5.000000e-01 : f32
    %221 = vector.broadcast %cst_56 : f32 to vector<4x1xf32>
    %222 = arith.mulf %221, %220 : vector<4x1xf32>
    %223 = vector.broadcast %222 : vector<4x1xf32> to vector<4x256xf32>
    %224 = arith.cmpf ogt, %80, %223 : vector<4x256xf32>
    %225 = arith.extui %224 : vector<4x256xi1> to vector<4x256xi32>
    %226 = arith.sitofp %225 : vector<4x256xi32> to vector<4x256xf32>
    %cst_57 = arith.constant dense<0.000000e+00> : vector<4xf32>
    %227 = vector.multi_reduction <add>, %226, %cst_57 [1] : vector<4x256xf32> to vector<4xf32>
    %228 = vector.shape_cast %227 : vector<4xf32> to vector<4x1xf32>
    %229 = arith.cmpf oge, %228, %84 : vector<4x1xf32>
    %230 = arith.select %229, %222, %218 : vector<4x1xi1>, vector<4x1xf32>
    %231 = arith.select %229, %219, %222 : vector<4x1xi1>, vector<4x1xf32>
    %c12_i32 = arith.constant 12 : i32
    %232 = arith.addf %230, %231 : vector<4x1xf32>
    %cst_58 = arith.constant 5.000000e-01 : f32
    %233 = vector.broadcast %cst_58 : f32 to vector<4x1xf32>
    %234 = arith.mulf %233, %232 : vector<4x1xf32>
    %235 = vector.broadcast %234 : vector<4x1xf32> to vector<4x256xf32>
    %236 = arith.cmpf ogt, %80, %235 : vector<4x256xf32>
    %237 = arith.extui %236 : vector<4x256xi1> to vector<4x256xi32>
    %238 = arith.sitofp %237 : vector<4x256xi32> to vector<4x256xf32>
    %cst_59 = arith.constant dense<0.000000e+00> : vector<4xf32>
    %239 = vector.multi_reduction <add>, %238, %cst_59 [1] : vector<4x256xf32> to vector<4xf32>
    %240 = vector.shape_cast %239 : vector<4xf32> to vector<4x1xf32>
    %241 = arith.cmpf oge, %240, %84 : vector<4x1xf32>
    %242 = arith.select %241, %234, %230 : vector<4x1xi1>, vector<4x1xf32>
    %243 = arith.select %241, %231, %234 : vector<4x1xi1>, vector<4x1xf32>
    %c13_i32 = arith.constant 13 : i32
    %244 = arith.addf %242, %243 : vector<4x1xf32>
    %cst_60 = arith.constant 5.000000e-01 : f32
    %245 = vector.broadcast %cst_60 : f32 to vector<4x1xf32>
    %246 = arith.mulf %245, %244 : vector<4x1xf32>
    %247 = vector.broadcast %246 : vector<4x1xf32> to vector<4x256xf32>
    %248 = arith.cmpf ogt, %80, %247 : vector<4x256xf32>
    %249 = arith.extui %248 : vector<4x256xi1> to vector<4x256xi32>
    %250 = arith.sitofp %249 : vector<4x256xi32> to vector<4x256xf32>
    %cst_61 = arith.constant dense<0.000000e+00> : vector<4xf32>
    %251 = vector.multi_reduction <add>, %250, %cst_61 [1] : vector<4x256xf32> to vector<4xf32>
    %252 = vector.shape_cast %251 : vector<4xf32> to vector<4x1xf32>
    %253 = arith.cmpf oge, %252, %84 : vector<4x1xf32>
    %254 = arith.select %253, %246, %242 : vector<4x1xi1>, vector<4x1xf32>
    %255 = arith.select %253, %243, %246 : vector<4x1xi1>, vector<4x1xf32>
    %c14_i32 = arith.constant 14 : i32
    %256 = arith.addf %254, %255 : vector<4x1xf32>
    %cst_62 = arith.constant 5.000000e-01 : f32
    %257 = vector.broadcast %cst_62 : f32 to vector<4x1xf32>
    %258 = arith.mulf %257, %256 : vector<4x1xf32>
    %259 = vector.broadcast %258 : vector<4x1xf32> to vector<4x256xf32>
    %260 = arith.cmpf ogt, %80, %259 : vector<4x256xf32>
    %261 = arith.extui %260 : vector<4x256xi1> to vector<4x256xi32>
    %262 = arith.sitofp %261 : vector<4x256xi32> to vector<4x256xf32>
    %cst_63 = arith.constant dense<0.000000e+00> : vector<4xf32>
    %263 = vector.multi_reduction <add>, %262, %cst_63 [1] : vector<4x256xf32> to vector<4xf32>
    %264 = vector.shape_cast %263 : vector<4xf32> to vector<4x1xf32>
    %265 = arith.cmpf oge, %264, %84 : vector<4x1xf32>
    %266 = arith.select %265, %258, %254 : vector<4x1xi1>, vector<4x1xf32>
    %267 = arith.select %265, %255, %258 : vector<4x1xi1>, vector<4x1xf32>
    %c15_i32 = arith.constant 15 : i32
    %268 = arith.addf %266, %267 : vector<4x1xf32>
    %cst_64 = arith.constant 5.000000e-01 : f32
    %269 = vector.broadcast %cst_64 : f32 to vector<4x1xf32>
    %270 = arith.mulf %269, %268 : vector<4x1xf32>
    %271 = vector.broadcast %270 : vector<4x1xf32> to vector<4x256xf32>
    %272 = arith.cmpf ogt, %80, %271 : vector<4x256xf32>
    %273 = arith.extui %272 : vector<4x256xi1> to vector<4x256xi32>
    %274 = arith.sitofp %273 : vector<4x256xi32> to vector<4x256xf32>
    %cst_65 = arith.constant dense<0.000000e+00> : vector<4xf32>
    %275 = vector.multi_reduction <add>, %274, %cst_65 [1] : vector<4x256xf32> to vector<4xf32>
    %276 = vector.shape_cast %275 : vector<4xf32> to vector<4x1xf32>
    %277 = arith.cmpf oge, %276, %84 : vector<4x1xf32>
    %278 = arith.select %277, %270, %266 : vector<4x1xi1>, vector<4x1xf32>
    %279 = arith.select %277, %267, %270 : vector<4x1xi1>, vector<4x1xf32>
    %c16_i32 = arith.constant 16 : i32
    %280 = arith.addf %278, %279 : vector<4x1xf32>
    %cst_66 = arith.constant 5.000000e-01 : f32
    %281 = vector.broadcast %cst_66 : f32 to vector<4x1xf32>
    %282 = arith.mulf %281, %280 : vector<4x1xf32>
    %283 = vector.broadcast %282 : vector<4x1xf32> to vector<4x256xf32>
    %284 = arith.cmpf ogt, %80, %283 : vector<4x256xf32>
    %285 = arith.extui %284 : vector<4x256xi1> to vector<4x256xi32>
    %286 = arith.sitofp %285 : vector<4x256xi32> to vector<4x256xf32>
    %cst_67 = arith.constant dense<0.000000e+00> : vector<4xf32>
    %287 = vector.multi_reduction <add>, %286, %cst_67 [1] : vector<4x256xf32> to vector<4xf32>
    %288 = vector.shape_cast %287 : vector<4xf32> to vector<4x1xf32>
    %289 = arith.cmpf oge, %288, %84 : vector<4x1xf32>
    %290 = arith.select %289, %282, %278 : vector<4x1xi1>, vector<4x1xf32>
    %291 = arith.select %289, %279, %282 : vector<4x1xi1>, vector<4x1xf32>
    %c17_i32 = arith.constant 17 : i32
    %292 = arith.addf %290, %291 : vector<4x1xf32>
    %cst_68 = arith.constant 5.000000e-01 : f32
    %293 = vector.broadcast %cst_68 : f32 to vector<4x1xf32>
    %294 = arith.mulf %293, %292 : vector<4x1xf32>
    %295 = vector.broadcast %294 : vector<4x1xf32> to vector<4x256xf32>
    %296 = arith.cmpf ogt, %80, %295 : vector<4x256xf32>
    %297 = arith.extui %296 : vector<4x256xi1> to vector<4x256xi32>
    %298 = arith.sitofp %297 : vector<4x256xi32> to vector<4x256xf32>
    %cst_69 = arith.constant dense<0.000000e+00> : vector<4xf32>
    %299 = vector.multi_reduction <add>, %298, %cst_69 [1] : vector<4x256xf32> to vector<4xf32>
    %300 = vector.shape_cast %299 : vector<4xf32> to vector<4x1xf32>
    %301 = arith.cmpf oge, %300, %84 : vector<4x1xf32>
    %302 = arith.select %301, %294, %290 : vector<4x1xi1>, vector<4x1xf32>
    %303 = arith.select %301, %291, %294 : vector<4x1xi1>, vector<4x1xf32>
    %c18_i32 = arith.constant 18 : i32
    %304 = arith.addf %302, %303 : vector<4x1xf32>
    %cst_70 = arith.constant 5.000000e-01 : f32
    %305 = vector.broadcast %cst_70 : f32 to vector<4x1xf32>
    %306 = arith.mulf %305, %304 : vector<4x1xf32>
    %307 = vector.broadcast %306 : vector<4x1xf32> to vector<4x256xf32>
    %308 = arith.cmpf ogt, %80, %307 : vector<4x256xf32>
    %309 = arith.extui %308 : vector<4x256xi1> to vector<4x256xi32>
    %310 = arith.sitofp %309 : vector<4x256xi32> to vector<4x256xf32>
    %cst_71 = arith.constant dense<0.000000e+00> : vector<4xf32>
    %311 = vector.multi_reduction <add>, %310, %cst_71 [1] : vector<4x256xf32> to vector<4xf32>
    %312 = vector.shape_cast %311 : vector<4xf32> to vector<4x1xf32>
    %313 = arith.cmpf oge, %312, %84 : vector<4x1xf32>
    %314 = arith.select %313, %306, %302 : vector<4x1xi1>, vector<4x1xf32>
    %315 = arith.select %313, %303, %306 : vector<4x1xi1>, vector<4x1xf32>
    %c19_i32 = arith.constant 19 : i32
    %316 = arith.addf %314, %315 : vector<4x1xf32>
    %cst_72 = arith.constant 5.000000e-01 : f32
    %317 = vector.broadcast %cst_72 : f32 to vector<4x1xf32>
    %318 = arith.mulf %317, %316 : vector<4x1xf32>
    %319 = vector.broadcast %318 : vector<4x1xf32> to vector<4x256xf32>
    %320 = arith.cmpf ogt, %80, %319 : vector<4x256xf32>
    %321 = arith.extui %320 : vector<4x256xi1> to vector<4x256xi32>
    %322 = arith.sitofp %321 : vector<4x256xi32> to vector<4x256xf32>
    %cst_73 = arith.constant dense<0.000000e+00> : vector<4xf32>
    %323 = vector.multi_reduction <add>, %322, %cst_73 [1] : vector<4x256xf32> to vector<4xf32>
    %324 = vector.shape_cast %323 : vector<4xf32> to vector<4x1xf32>
    %325 = arith.cmpf oge, %324, %84 : vector<4x1xf32>
    %326 = arith.select %325, %318, %314 : vector<4x1xi1>, vector<4x1xf32>
    %327 = arith.select %325, %315, %318 : vector<4x1xi1>, vector<4x1xf32>
    %c20_i32 = arith.constant 20 : i32
    %328 = arith.addf %326, %327 : vector<4x1xf32>
    %cst_74 = arith.constant 5.000000e-01 : f32
    %329 = vector.broadcast %cst_74 : f32 to vector<4x1xf32>
    %330 = arith.mulf %329, %328 : vector<4x1xf32>
    %331 = vector.broadcast %330 : vector<4x1xf32> to vector<4x256xf32>
    %332 = arith.cmpf ogt, %80, %331 : vector<4x256xf32>
    %333 = arith.extui %332 : vector<4x256xi1> to vector<4x256xi32>
    %334 = arith.sitofp %333 : vector<4x256xi32> to vector<4x256xf32>
    %cst_75 = arith.constant dense<0.000000e+00> : vector<4xf32>
    %335 = vector.multi_reduction <add>, %334, %cst_75 [1] : vector<4x256xf32> to vector<4xf32>
    %336 = vector.shape_cast %335 : vector<4xf32> to vector<4x1xf32>
    %337 = arith.cmpf oge, %336, %84 : vector<4x1xf32>
    %338 = arith.select %337, %330, %326 : vector<4x1xi1>, vector<4x1xf32>
    %339 = arith.select %337, %327, %330 : vector<4x1xi1>, vector<4x1xf32>
    %c21_i32 = arith.constant 21 : i32
    %340 = arith.addf %338, %339 : vector<4x1xf32>
    %cst_76 = arith.constant 5.000000e-01 : f32
    %341 = vector.broadcast %cst_76 : f32 to vector<4x1xf32>
    %342 = arith.mulf %341, %340 : vector<4x1xf32>
    %343 = vector.broadcast %342 : vector<4x1xf32> to vector<4x256xf32>
    %344 = arith.cmpf ogt, %80, %343 : vector<4x256xf32>
    %345 = arith.extui %344 : vector<4x256xi1> to vector<4x256xi32>
    %346 = arith.sitofp %345 : vector<4x256xi32> to vector<4x256xf32>
    %cst_77 = arith.constant dense<0.000000e+00> : vector<4xf32>
    %347 = vector.multi_reduction <add>, %346, %cst_77 [1] : vector<4x256xf32> to vector<4xf32>
    %348 = vector.shape_cast %347 : vector<4xf32> to vector<4x1xf32>
    %349 = arith.cmpf oge, %348, %84 : vector<4x1xf32>
    %350 = arith.select %349, %342, %338 : vector<4x1xi1>, vector<4x1xf32>
    %351 = arith.select %349, %339, %342 : vector<4x1xi1>, vector<4x1xf32>
    %c22_i32 = arith.constant 22 : i32
    %352 = arith.addf %350, %351 : vector<4x1xf32>
    %cst_78 = arith.constant 5.000000e-01 : f32
    %353 = vector.broadcast %cst_78 : f32 to vector<4x1xf32>
    %354 = arith.mulf %353, %352 : vector<4x1xf32>
    %355 = vector.broadcast %354 : vector<4x1xf32> to vector<4x256xf32>
    %356 = arith.cmpf ogt, %80, %355 : vector<4x256xf32>
    %357 = arith.extui %356 : vector<4x256xi1> to vector<4x256xi32>
    %358 = arith.sitofp %357 : vector<4x256xi32> to vector<4x256xf32>
    %cst_79 = arith.constant dense<0.000000e+00> : vector<4xf32>
    %359 = vector.multi_reduction <add>, %358, %cst_79 [1] : vector<4x256xf32> to vector<4xf32>
    %360 = vector.shape_cast %359 : vector<4xf32> to vector<4x1xf32>
    %361 = arith.cmpf oge, %360, %84 : vector<4x1xf32>
    %362 = arith.select %361, %354, %350 : vector<4x1xi1>, vector<4x1xf32>
    %363 = arith.select %361, %351, %354 : vector<4x1xi1>, vector<4x1xf32>
    %c23_i32 = arith.constant 23 : i32
    %364 = arith.addf %362, %363 : vector<4x1xf32>
    %cst_80 = arith.constant 5.000000e-01 : f32
    %365 = vector.broadcast %cst_80 : f32 to vector<4x1xf32>
    %366 = arith.mulf %365, %364 : vector<4x1xf32>
    %367 = vector.broadcast %366 : vector<4x1xf32> to vector<4x256xf32>
    %368 = arith.cmpf ogt, %80, %367 : vector<4x256xf32>
    %369 = arith.extui %368 : vector<4x256xi1> to vector<4x256xi32>
    %370 = arith.sitofp %369 : vector<4x256xi32> to vector<4x256xf32>
    %cst_81 = arith.constant dense<0.000000e+00> : vector<4xf32>
    %371 = vector.multi_reduction <add>, %370, %cst_81 [1] : vector<4x256xf32> to vector<4xf32>
    %372 = vector.shape_cast %371 : vector<4xf32> to vector<4x1xf32>
    %373 = arith.cmpf oge, %372, %84 : vector<4x1xf32>
    %374 = arith.select %373, %366, %362 : vector<4x1xi1>, vector<4x1xf32>
    %375 = arith.select %373, %363, %366 : vector<4x1xi1>, vector<4x1xf32>
    %c24_i32 = arith.constant 24 : i32
    %376 = arith.addf %374, %375 : vector<4x1xf32>
    %cst_82 = arith.constant 5.000000e-01 : f32
    %377 = vector.broadcast %cst_82 : f32 to vector<4x1xf32>
    %378 = arith.mulf %377, %376 : vector<4x1xf32>
    %379 = vector.broadcast %378 : vector<4x1xf32> to vector<4x256xf32>
    %380 = arith.cmpf ogt, %80, %379 : vector<4x256xf32>
    %381 = arith.extui %380 : vector<4x256xi1> to vector<4x256xi32>
    %382 = arith.sitofp %381 : vector<4x256xi32> to vector<4x256xf32>
    %cst_83 = arith.constant dense<0.000000e+00> : vector<4xf32>
    %383 = vector.multi_reduction <add>, %382, %cst_83 [1] : vector<4x256xf32> to vector<4xf32>
    %384 = vector.shape_cast %383 : vector<4xf32> to vector<4x1xf32>
    %385 = arith.cmpf oge, %384, %84 : vector<4x1xf32>
    %386 = arith.select %385, %378, %374 : vector<4x1xi1>, vector<4x1xf32>
    %387 = arith.select %385, %375, %378 : vector<4x1xi1>, vector<4x1xf32>
    %c25_i32 = arith.constant 25 : i32
    %388 = arith.addf %386, %387 : vector<4x1xf32>
    %cst_84 = arith.constant 5.000000e-01 : f32
    %389 = vector.broadcast %cst_84 : f32 to vector<4x1xf32>
    %390 = arith.mulf %389, %388 : vector<4x1xf32>
    %391 = vector.broadcast %390 : vector<4x1xf32> to vector<4x256xf32>
    %392 = arith.cmpf ogt, %80, %391 : vector<4x256xf32>
    %393 = arith.extui %392 : vector<4x256xi1> to vector<4x256xi32>
    %394 = arith.sitofp %393 : vector<4x256xi32> to vector<4x256xf32>
    %cst_85 = arith.constant dense<0.000000e+00> : vector<4xf32>
    %395 = vector.multi_reduction <add>, %394, %cst_85 [1] : vector<4x256xf32> to vector<4xf32>
    %396 = vector.shape_cast %395 : vector<4xf32> to vector<4x1xf32>
    %397 = arith.cmpf oge, %396, %84 : vector<4x1xf32>
    %398 = arith.select %397, %390, %386 : vector<4x1xi1>, vector<4x1xf32>
    %399 = arith.select %397, %387, %390 : vector<4x1xi1>, vector<4x1xf32>
    %c26_i32 = arith.constant 26 : i32
    %400 = arith.addf %398, %399 : vector<4x1xf32>
    %cst_86 = arith.constant 5.000000e-01 : f32
    %401 = vector.broadcast %cst_86 : f32 to vector<4x1xf32>
    %402 = arith.mulf %401, %400 : vector<4x1xf32>
    %403 = vector.broadcast %402 : vector<4x1xf32> to vector<4x256xf32>
    %404 = arith.cmpf ogt, %80, %403 : vector<4x256xf32>
    %405 = arith.extui %404 : vector<4x256xi1> to vector<4x256xi32>
    %406 = arith.sitofp %405 : vector<4x256xi32> to vector<4x256xf32>
    %cst_87 = arith.constant dense<0.000000e+00> : vector<4xf32>
    %407 = vector.multi_reduction <add>, %406, %cst_87 [1] : vector<4x256xf32> to vector<4xf32>
    %408 = vector.shape_cast %407 : vector<4xf32> to vector<4x1xf32>
    %409 = arith.cmpf oge, %408, %84 : vector<4x1xf32>
    %410 = arith.select %409, %402, %398 : vector<4x1xi1>, vector<4x1xf32>
    %411 = arith.select %409, %399, %402 : vector<4x1xi1>, vector<4x1xf32>
    %c27_i32 = arith.constant 27 : i32
    %412 = arith.addf %410, %411 : vector<4x1xf32>
    %cst_88 = arith.constant 5.000000e-01 : f32
    %413 = vector.broadcast %cst_88 : f32 to vector<4x1xf32>
    %414 = arith.mulf %413, %412 : vector<4x1xf32>
    %415 = vector.broadcast %414 : vector<4x1xf32> to vector<4x256xf32>
    %416 = arith.cmpf ogt, %80, %415 : vector<4x256xf32>
    %417 = arith.extui %416 : vector<4x256xi1> to vector<4x256xi32>
    %418 = arith.sitofp %417 : vector<4x256xi32> to vector<4x256xf32>
    %cst_89 = arith.constant dense<0.000000e+00> : vector<4xf32>
    %419 = vector.multi_reduction <add>, %418, %cst_89 [1] : vector<4x256xf32> to vector<4xf32>
    %420 = vector.shape_cast %419 : vector<4xf32> to vector<4x1xf32>
    %421 = arith.cmpf oge, %420, %84 : vector<4x1xf32>
    %422 = arith.select %421, %414, %410 : vector<4x1xi1>, vector<4x1xf32>
    %423 = arith.select %421, %411, %414 : vector<4x1xi1>, vector<4x1xf32>
    %c28_i32 = arith.constant 28 : i32
    %424 = arith.addf %422, %423 : vector<4x1xf32>
    %cst_90 = arith.constant 5.000000e-01 : f32
    %425 = vector.broadcast %cst_90 : f32 to vector<4x1xf32>
    %426 = arith.mulf %425, %424 : vector<4x1xf32>
    %427 = vector.broadcast %426 : vector<4x1xf32> to vector<4x256xf32>
    %428 = arith.cmpf ogt, %80, %427 : vector<4x256xf32>
    %429 = arith.extui %428 : vector<4x256xi1> to vector<4x256xi32>
    %430 = arith.sitofp %429 : vector<4x256xi32> to vector<4x256xf32>
    %cst_91 = arith.constant dense<0.000000e+00> : vector<4xf32>
    %431 = vector.multi_reduction <add>, %430, %cst_91 [1] : vector<4x256xf32> to vector<4xf32>
    %432 = vector.shape_cast %431 : vector<4xf32> to vector<4x1xf32>
    %433 = arith.cmpf oge, %432, %84 : vector<4x1xf32>
    %434 = arith.select %433, %426, %422 : vector<4x1xi1>, vector<4x1xf32>
    %435 = arith.select %433, %423, %426 : vector<4x1xi1>, vector<4x1xf32>
    %c29_i32 = arith.constant 29 : i32
    %436 = arith.addf %434, %435 : vector<4x1xf32>
    %cst_92 = arith.constant 5.000000e-01 : f32
    %437 = vector.broadcast %cst_92 : f32 to vector<4x1xf32>
    %438 = arith.mulf %437, %436 : vector<4x1xf32>
    %439 = vector.broadcast %438 : vector<4x1xf32> to vector<4x256xf32>
    %440 = arith.cmpf ogt, %80, %439 : vector<4x256xf32>
    %441 = arith.extui %440 : vector<4x256xi1> to vector<4x256xi32>
    %442 = arith.sitofp %441 : vector<4x256xi32> to vector<4x256xf32>
    %cst_93 = arith.constant dense<0.000000e+00> : vector<4xf32>
    %443 = vector.multi_reduction <add>, %442, %cst_93 [1] : vector<4x256xf32> to vector<4xf32>
    %444 = vector.shape_cast %443 : vector<4xf32> to vector<4x1xf32>
    %445 = arith.cmpf oge, %444, %84 : vector<4x1xf32>
    %446 = arith.select %445, %438, %434 : vector<4x1xi1>, vector<4x1xf32>
    %447 = arith.select %445, %435, %438 : vector<4x1xi1>, vector<4x1xf32>
    %c30_i32 = arith.constant 30 : i32
    %448 = arith.addf %446, %447 : vector<4x1xf32>
    %cst_94 = arith.constant 5.000000e-01 : f32
    %449 = vector.broadcast %cst_94 : f32 to vector<4x1xf32>
    %450 = arith.mulf %449, %448 : vector<4x1xf32>
    %451 = vector.broadcast %450 : vector<4x1xf32> to vector<4x256xf32>
    %452 = arith.cmpf ogt, %80, %451 : vector<4x256xf32>
    %453 = arith.extui %452 : vector<4x256xi1> to vector<4x256xi32>
    %454 = arith.sitofp %453 : vector<4x256xi32> to vector<4x256xf32>
    %cst_95 = arith.constant dense<0.000000e+00> : vector<4xf32>
    %455 = vector.multi_reduction <add>, %454, %cst_95 [1] : vector<4x256xf32> to vector<4xf32>
    %456 = vector.shape_cast %455 : vector<4xf32> to vector<4x1xf32>
    %457 = arith.cmpf oge, %456, %84 : vector<4x1xf32>
    %458 = arith.select %457, %450, %446 : vector<4x1xi1>, vector<4x1xf32>
    %459 = arith.select %457, %447, %450 : vector<4x1xi1>, vector<4x1xf32>
    %c31_i32 = arith.constant 31 : i32
    %460 = arith.addf %458, %459 : vector<4x1xf32>
    %cst_96 = arith.constant 5.000000e-01 : f32
    %461 = vector.broadcast %cst_96 : f32 to vector<4x1xf32>
    %462 = arith.mulf %461, %460 : vector<4x1xf32>
    %463 = vector.broadcast %462 : vector<4x1xf32> to vector<4x256xf32>
    %464 = arith.cmpf ogt, %80, %463 : vector<4x256xf32>
    %465 = arith.extui %464 : vector<4x256xi1> to vector<4x256xi32>
    %466 = arith.sitofp %465 : vector<4x256xi32> to vector<4x256xf32>
    %cst_97 = arith.constant dense<0.000000e+00> : vector<4xf32>
    %467 = vector.multi_reduction <add>, %466, %cst_97 [1] : vector<4x256xf32> to vector<4xf32>
    %468 = vector.shape_cast %467 : vector<4xf32> to vector<4x1xf32>
    %469 = arith.cmpf oge, %468, %84 : vector<4x1xf32>
    %470 = arith.select %469, %462, %458 : vector<4x1xi1>, vector<4x1xf32>
    %471 = arith.select %469, %459, %462 : vector<4x1xi1>, vector<4x1xf32>
    %472 = vector.broadcast %471 : vector<4x1xf32> to vector<4x256xf32>
    %473 = arith.cmpf ole, %80, %472 : vector<4x256xf32>
    %cst_98 = arith.constant 0xFF800000 : f32
    %474 = vector.broadcast %cst_98 : f32 to vector<4x256xf32>
    %475 = arith.select %473, %80, %474 : vector<4x256xi1>, vector<4x256xf32>
    %cst_99 = arith.constant dense<0xFF800000> : vector<4xf32>
    %476 = vector.multi_reduction <maximumf>, %475, %cst_99 [1] : vector<4x256xf32> to vector<4xf32>
    %477 = vector.shape_cast %476 : vector<4xf32> to vector<4x1xf32>
    %478 = vector.broadcast %477 : vector<4x1xf32> to vector<4x256xf32>
    %479 = arith.cmpf ogt, %80, %478 : vector<4x256xf32>
    %480 = arith.extui %479 : vector<4x256xi1> to vector<4x256xi32>
    %481 = arith.sitofp %480 : vector<4x256xi32> to vector<4x256xf32>
    %cst_100 = arith.constant dense<0.000000e+00> : vector<4xf32>
    %482 = vector.multi_reduction <add>, %481, %cst_100 [1] : vector<4x256xf32> to vector<4xf32>
    %483 = vector.shape_cast %482 : vector<4xf32> to vector<4x1xf32>
    %484 = arith.mulf %80, %481 : vector<4x256xf32>
    %cst_101 = arith.constant dense<0.000000e+00> : vector<4xf32>
    %485 = vector.multi_reduction <add>, %484, %cst_101 [1] : vector<4x256xf32> to vector<4xf32>
    %486 = vector.shape_cast %485 : vector<4xf32> to vector<4x1xf32>
    %487 = arith.subf %84, %483 : vector<4x1xf32>
    %488 = arith.mulf %487, %477 : vector<4x1xf32>
    %489 = arith.addf %486, %488 : vector<4x1xf32>
    %490 = arith.mulf %75, %52 : vector<4x256xf32>
    %cst_102 = arith.constant dense<0.000000e+00> : vector<4xf32>
    %491 = vector.multi_reduction <add>, %490, %cst_102 [1] : vector<4x256xf32> to vector<4xf32>
    %492 = vector.shape_cast %491 : vector<4xf32> to vector<4x1xf32>
    %493 = arith.addf %492, %489 : vector<4x1xf32>
    %494 = arith.addf %57, %493 : vector<4x1xf32>
    %cst_103 = arith.constant 0.000000e+00 : f32
    %495 = vector.broadcast %cst_103 : f32 to vector<4x1xf32>
    %496 = arith.cmpf ogt, %54, %495 : vector<4x1xf32>
    %497 = arith.extui %496 : vector<4x1xi1> to vector<4x1xi32>
    %498 = arith.sitofp %497 : vector<4x1xi32> to vector<4x1xf32>
    %499 = arith.mulf %494, %498 : vector<4x1xf32>
    %cst_104 = arith.constant 9.99999997E-7 : f32
    %500 = vector.broadcast %cst_104 : f32 to vector<4x1xf32>
    %501 = arith.maximumf %54, %500 : vector<4x1xf32>
    %502 = arith.divf %499, %501 : vector<4x1xf32>
    %503 = vector.shape_cast %502 : vector<4x1xf32> to vector<4x1xf32>
    %504 = vector.broadcast %503 : vector<4x1xf32> to vector<4x128xf32>
    %c0_105 = arith.constant 0 : index
    %c0_106 = arith.constant 0 : index
    %505 = vector.load %arg6[%c0_105, %c0_106] : memref<4x128xf32, #tpu.memory_space<vmem>>, vector<4x128xf32>
    tpu.vector_store %arg6[%c0_105, %c0_106], %504 {strides = array<i32>} : memref<4x128xf32, #tpu.memory_space<vmem>>, vector<4x128xf32>,
    return
  }
  func.func @transform_0(%arg0: i32) -> (i32, i32, i32) {
    %c0_i32 = arith.constant 0 : i32
    %c0_i32_0 = arith.constant 0 : i32
    %c0_i32_1 = arith.constant 0 : i32
    %c0_i32_2 = arith.constant 0 : i32
    return %c0_i32, %c0_i32_0, %c0_i32_1 : i32, i32, i32
  }
  func.func @transform_1(%arg0: i32) -> (i32, i32, i32) {
    %c0_i32 = arith.constant 0 : i32
    %c0_i32_0 = arith.constant 0 : i32
    %c0_i32_1 = arith.constant 0 : i32
    return %arg0, %c0_i32, %c0_i32_0 : i32, i32, i32
  }
  func.func @transform_2(%arg0: i32) -> (i32, i32, i32) {
    %c0_i32 = arith.constant 0 : i32
    %c0_i32_0 = arith.constant 0 : i32
    %c0_i32_1 = arith.constant 0 : i32
    return %arg0, %c0_i32, %c0_i32_0 : i32, i32, i32
  }
  func.func @transform_3(%arg0: i32) -> (i32, i32, i32) {
    %c0_i32 = arith.constant 0 : i32
    %c0_i32_0 = arith.constant 0 : i32
    %c0_i32_1 = arith.constant 0 : i32
    return %arg0, %c0_i32, %c0_i32_0 : i32, i32, i32
  }
  func.func @transform_4(%arg0: i32) -> (i32, i32) {
    %c0_i32 = arith.constant 0 : i32
    %c0_i32_0 = arith.constant 0 : i32
    return %arg0, %c0_i32 : i32, i32
  }
  func.func @transform_5(%arg0: i32) -> (i32, i32) {
    %c0_i32 = arith.constant 0 : i32
    %c0_i32_0 = arith.constant 0 : i32
    return %arg0, %c0_i32 : i32, i32
  }
}

</mosaic_0001>

<llo_original>
// kernel: tpu_custom_call.1
$region0: #{tpu_custom_call.1}
  #allocation0 [shape = 'u32[]', space=smem, size = 0x4, offset = 0x4, fixed_abs, tag = 'smem constant byte address 0x4 - core index']
  #allocation1 [shape = 'u32[144,128]{1,0:T(1,128)}', space=vmem, size = 0x12000, scoped, tag = 'internal scratch']
  %s0 = inlined_call_operand.hbm [shape: f32[1,4,256], index: 0, kind: input, shape index: {}]
  %s1 = inlined_call_operand.hbm [shape: f32[4,4,256], index: 1, kind: input, shape index: {}]
  %s2 = inlined_call_operand.hbm [shape: f32[4,4,256], index: 2, kind: input, shape index: {}]
  %s3 = inlined_call_operand.hbm [shape: f32[4,8,256], index: 3, kind: input, shape index: {}]
  %s4 = inlined_call_operand.vmem [shape: s32[4,256], index: 4, kind: input, shape index: {}]
  %s5 = inlined_call_operand.hbm [shape: f32[4,128], index: 5, kind: output, shape index: {}]
  %s6 = sld [smem:[#allocation0]]
  $region46: #{tpu_custom_call.1} parent=0
    _
  %s8 = ssub.s32 1, %s6
  %s9 = scalar_select 0, %s8, %s6
  $region1: #{tpu_custom_call.1} parent=0
    #allocation2 [shape = 'u8[4096]{0}', space=vmem, size = 0x1000, scoped, tag = 'input window, operand 0, single buffered']
    #allocation3 [shape = 's32[1]{0}', space=sflag, size = 0x4, scoped, tag = 'scoped memory for tpu_custom_call.1']
    #allocation4 [shape = 's32[1]{0}', space=sflag, size = 0x4, scoped, tag = 'scoped memory for tpu_custom_call.1']
    #allocation5 [shape = 'u8[16384]{0}', space=vmem, size = 0x4000, scoped, tag = 'input window, operand 1, single buffered']
    #allocation6 [shape = 's32[1]{0}', space=sflag, size = 0x4, scoped, tag = 'scoped memory for tpu_custom_call.1']
    #allocation7 [shape = 'u8[16384]{0}', space=vmem, size = 0x4000, scoped, tag = 'input window, operand 2, single buffered']
    #allocation8 [shape = 'u8[32768]{0}', space=vmem, size = 0x8000, scoped, tag = 'input window, operand 3, single buffered']
    #allocation9 [shape = 's32[1]{0}', space=sflag, size = 0x4, scoped, tag = 'scoped memory for tpu_custom_call.1']
    #allocation10 [shape = 'u8[2048]{0}', space=vmem, size = 0x800, scoped, tag = 'output window, operand 0, single buffered']
    %10 = vsyncpa [#allocation3], 0
    %11 = vsyncpa [#allocation6], 0
    %12 = vsyncpa [#allocation9], 0
    %13 = vsyncpa [#allocation4], 0
    // Predicated region
    $region2: #{tpu_custom_call.1} parent=1 // pred_check
      _
    $region3: #{tpu_custom_call.1} parent=1 // pred_check_branch
      %15 = sbr.rel (0) target = $region5
    $region4: #{tpu_custom_call.1} parent=1 // pred_region
      %s17 = ssub.s32 128, 128
      %18 = vsyncadd [#allocation3], %s17
      %s20 = sshll.u32 [#allocation2], 4
      %s21 = int_to_ptr.vmem [resolvable:$true] %s20
      %23 = dma.hbm_to_vmem [thread:$0]  %s0, 128, %s21, [#allocation3]
    $region5: #{tpu_custom_call.1} parent=1 // pred_fallthru
      _
    // Predicated region
    $region6: #{tpu_custom_call.1} parent=1 // pred_check
      _
    $region7: #{tpu_custom_call.1} parent=1 // pred_check_branch
      %25 = sbr.rel (0) target = $region9
    $region8: #{tpu_custom_call.1} parent=1 // pred_region
      %s27 = ssub.s32 512, 512
      %28 = vsyncadd [#allocation6], %s27
      %s29 = sshll.u32 [#allocation5], 4
      %s30 = int_to_ptr.vmem [resolvable:$true] %s29
      %35 = dma.hbm_to_vmem [thread:$0]  %s1, 512, %s30, [#allocation6], 128, 128, 8
    $region9: #{tpu_custom_call.1} parent=1 // pred_fallthru
      _
    // Predicated region
    $region10: #{tpu_custom_call.1} parent=1 // pred_check
      _
    $region11: #{tpu_custom_call.1} parent=1 // pred_check_branch
      %37 = sbr.rel (0) target = $region13
    $region12: #{tpu_custom_call.1} parent=1 // pred_region
      %s39 = ssub.s32 512, 512
      %40 = vsyncadd [#allocation6], %s39
      %s41 = sshll.u32 [#allocation7], 4
      %s42 = int_to_ptr.vmem [resolvable:$true] %s41
      %47 = dma.hbm_to_vmem [thread:$0]  %s2, 512, %s42, [#allocation6], 128, 128, 8
    $region13: #{tpu_custom_call.1} parent=1 // pred_fallthru
      _
    // Predicated region
    $region14: #{tpu_custom_call.1} parent=1 // pred_check
      _
    $region15: #{tpu_custom_call.1} parent=1 // pred_check_branch
      %49 = sbr.rel (0) target = $region17
    $region16: #{tpu_custom_call.1} parent=1 // pred_region
      %s51 = ssub.s32 1024, 1024
      %52 = vsyncadd [#allocation9], %s51
      %s53 = sshll.u32 [#allocation8], 4
      %s54 = int_to_ptr.vmem [resolvable:$true] %s53
      %59 = dma.hbm_to_vmem [thread:$0]  %s3, 1024, %s54, [#allocation9], 256, 256, 16
    $region17: #{tpu_custom_call.1} parent=1 // pred_fallthru
      _
    // Predicated region
    $region18: #{tpu_custom_call.1} parent=1 // pred_check
      _
    $region19: #{tpu_custom_call.1} parent=1 // pred_check_branch
      %61 = sbr.rel (0) target = $region21
    $region20: #{tpu_custom_call.1} parent=1 // pred_region
      _
    $region21: #{tpu_custom_call.1} parent=1 // pred_fallthru
      _
    // Predicated region
    $region22: #{tpu_custom_call.1} parent=1 // pred_check
      _
    $region23: #{tpu_custom_call.1} parent=1 // pred_check_branch
      %63 = sbr.rel (0) target = $region25
    $region24: #{tpu_custom_call.1} parent=1 // pred_region
      %64 = dma.done [#allocation3], 128
    $region25: #{tpu_custom_call.1} parent=1 // pred_fallthru
      _
    // Predicated region
    $region26: #{tpu_custom_call.1} parent=1 // pred_check
      _
    $region27: #{tpu_custom_call.1} parent=1 // pred_check_branch
      %66 = sbr.rel (0) target = $region29
    $region28: #{tpu_custom_call.1} parent=1 // pred_region
      %67 = dma.done [#allocation6], 512
    $region29: #{tpu_custom_call.1} parent=1 // pred_fallthru
      _
    // Predicated region
    $region30: #{tpu_custom_call.1} parent=1 // pred_check
      _
    $region31: #{tpu_custom_call.1} parent=1 // pred_check_branch
      %69 = sbr.rel (0) target = $region33
    $region32: #{tpu_custom_call.1} parent=1 // pred_region
      %70 = dma.done [#allocation6], 512
    $region33: #{tpu_custom_call.1} parent=1 // pred_fallthru
      _
    // Predicated region
    $region34: #{tpu_custom_call.1} parent=1 // pred_check
      _
    $region35: #{tpu_custom_call.1} parent=1 // pred_check_branch
      %72 = sbr.rel (0) target = $region37
    $region36: #{tpu_custom_call.1} parent=1 // pred_region
      %73 = dma.done [#allocation9], 1024
    $region37: #{tpu_custom_call.1} parent=1 // pred_fallthru
      _
    %v74 = vld [vmem:[#allocation2] sm:$0xff]
    %v75 = vld [vmem:[#allocation5] sm:$0xff]
    %v76 = vld [vmem:[#allocation5 + $0x8] sm:$0xff]
    %v77 = vld [vmem:[#allocation5 + $0x10] sm:$0xff]
    %v78 = vld [vmem:[#allocation5 + $0x18] sm:$0xff]
    %v79 = vld [vmem:[#allocation7] sm:$0xff]
    %v80 = vld [vmem:[#allocation7 + $0x8] sm:$0xff]
    %v81 = vld [vmem:[#allocation7 + $0x10] sm:$0xff]
    %v82 = vld [vmem:[#allocation7 + $0x18] sm:$0xff]
    %v83 = vld [vmem:[#allocation8] sm:$0xff]
    %v84 = vld [vmem:[#allocation8 + $0x8] sm:$0xff]
    %v85 = vld [vmem:[#allocation8 + $0x10] sm:$0xff]
    %v86 = vld [vmem:[#allocation8 + $0x18] sm:$0xff]
    %v87 = vld [vmem:[#allocation8 + $0x20] sm:$0xff]
    %v88 = vld [vmem:[#allocation8 + $0x28] sm:$0xff]
    %v89 = vld [vmem:[#allocation8 + $0x30] sm:$0xff]
    %v90 = vld [vmem:[#allocation8 + $0x38] sm:$0xff]
    %v91 = vld [vmem:[%s4] sm:$0xff]
    %v92 = vsub.f32 %v79, %v74
    %v93 = vsub.f32 %v80, %v74
    %v94 = vsub.f32 %v81, %v74
    %v95 = vsub.f32 %v82, %v74
    %v96 = vmul.f32 %v92, 10.0
    %v97 = vmul.f32 %v93, 10.0
    %v98 = vmul.f32 %v94, 10.0
    %v99 = vmul.f32 %v95, 10.0
    %v101 = vrot.slane %v74, 6
    %v102 = vrot.slane %v101, 4
    %v104 = vrcp.pop %v102
    %v105 = vmul.f32 %v96, %v104
    %v106 = vmul.f32 %v97, %v104
    %v107 = vmul.f32 %v98, %v104
    %v108 = vmul.f32 %v99, %v104
    %v109 = vrcp.pop %v74
    %v110 = vmul.f32 %v79, %v109
    %v111 = vmul.f32 %v80, %v109
    %v112 = vmul.f32 %v81, %v109
    %v113 = vmul.f32 %v82, %v109
    %v114 = vlog2.pop %v110
    %v115 = vmul.f32 %v114, 0.6931472
    %v116 = vlog2.pop %v111
    %v117 = vmul.f32 %v116, 0.6931472
    %v118 = vlog2.pop %v112
    %v119 = vmul.f32 %v118, 0.6931472
    %v120 = vlog2.pop %v113
    %v121 = vmul.f32 %v120, 0.6931472
    %v122 = vmul.f32 %v115, 5.0
    %v123 = vmul.f32 %v117, 5.0
    %v124 = vmul.f32 %v119, 5.0
    %v125 = vmul.f32 %v121, 5.0
    %v126 = vsub.f32 %v75, %v105
    %v127 = vsub.f32 %v76, %v106
    %v128 = vsub.f32 %v77, %v107
    %v129 = vsub.f32 %v78, %v108
    %v130 = vsub.f32 %v75, %v122
    %v131 = vsub.f32 %v76, %v123
    %v132 = vsub.f32 %v77, %v124
    %v133 = vsub.f32 %v78, %v125
    %v134 = vand.u32 2147483647, %v126
    %v135 = vand.u32 2147483647, %v127
    %v136 = vand.u32 2147483647, %v128
    %v137 = vand.u32 2147483647, %v129
    %vm138 = vcmp.lt.f32.partialorder %v134, 1.0
    %vm139 = vcmp.lt.f32.partialorder %v135, 1.0
    %vm140 = vcmp.lt.f32.partialorder %v136, 1.0
    %vm141 = vcmp.lt.f32.partialorder %v137, 1.0
    %v142 = vmul.f32 %v126, 0.5
    %v143 = vmul.f32 %v127, 0.5
    %v144 = vmul.f32 %v128, 0.5
    %v145 = vmul.f32 %v129, 0.5
    %v146 = vmul.f32 %v142, %v126
    %v147 = vmul.f32 %v143, %v127
    %v148 = vmul.f32 %v144, %v128
    %v149 = vmul.f32 %v145, %v129
    %v150 = vsub.f32 %v134, 0.5
    %v151 = vsub.f32 %v135, 0.5
    %v152 = vsub.f32 %v136, 0.5
    %v153 = vsub.f32 %v137, 0.5
    %v154 = vsel %vm138, %v146, %v150
    %v155 = vsel %vm139, %v147, %v151
    %v156 = vsel %vm140, %v148, %v152
    %v157 = vsel %vm141, %v149, %v153
    %v162 = vcombine.high %v154, %v154
    %v163 = vcombine.high %v155, %v155
    %v164 = vcombine.high %v156, %v156
    %v165 = vcombine.high %v157, %v157
    %vm170 = vcmask 1041408
    %v171 = vsel %vm170, %v154, 0.0
    %v172 = vrot.slane %v171, 4
    %v173 = vadd.f32 %v171, %v172
    %v174 = vrot.slane %v173, 2
    %v175 = vadd.f32 %v173, %v174
    %v176 = vrot.slane %v175, 1
    %v177 = vadd.f32 %v175, %v176
    %v178 = vsel %vm170, %v162, 0.0
    %v179 = vrot.slane %v178, 4
    %v180 = vadd.f32 %v178, %v179
    %v181 = vrot.slane %v180, 2
    %v182 = vadd.f32 %v180, %v181
    %v183 = vrot.slane %v182, 1
    %v184 = vadd.f32 %v182, %v183
    %v185 = vsel %vm170, %v155, 0.0
    %v186 = vrot.slane %v185, 4
    %v187 = vadd.f32 %v185, %v186
    %v188 = vrot.slane %v187, 2
    %v189 = vadd.f32 %v187, %v188
    %v190 = vrot.slane %v189, 1
    %v191 = vadd.f32 %v189, %v190
    %v192 = vsel %vm170, %v163, 0.0
    %v193 = vrot.slane %v192, 4
    %v194 = vadd.f32 %v192, %v193
    %v195 = vrot.slane %v194, 2
    %v196 = vadd.f32 %v194, %v195
    %v197 = vrot.slane %v196, 1
    %v198 = vadd.f32 %v196, %v197
    %v199 = vsel %vm170, %v156, 0.0
    %v200 = vrot.slane %v199, 4
    %v201 = vadd.f32 %v199, %v200
    %v202 = vrot.slane %v201, 2
    %v203 = vadd.f32 %v201, %v202
    %v204 = vrot.slane %v203, 1
    %v205 = vadd.f32 %v203, %v204
    %v206 = vsel %vm170, %v164, 0.0
    %v207 = vrot.slane %v206, 4
    %v208 = vadd.f32 %v206, %v207
    %v209 = vrot.slane %v208, 2
    %v210 = vadd.f32 %v208, %v209
    %v211 = vrot.slane %v210, 1
    %v212 = vadd.f32 %v210, %v211
    %v213 = vsel %vm170, %v157, 0.0
    %v214 = vrot.slane %v213, 4
    %v215 = vadd.f32 %v213, %v214
    %v216 = vrot.slane %v215, 2
    %v217 = vadd.f32 %v215, %v216
    %v218 = vrot.slane %v217, 1
    %v219 = vadd.f32 %v217, %v218
    %v220 = vsel %vm170, %v165, 0.0
    %v221 = vrot.slane %v220, 4
    %v222 = vadd.f32 %v220, %v221
    %v223 = vrot.slane %v222, 2
    %v224 = vadd.f32 %v222, %v223
    %v225 = vrot.slane %v224, 1
    %v226 = vadd.f32 %v224, %v225
    %v227 = vand.u32 2147483647, %v130
    %v228 = vand.u32 2147483647, %v131
    %v229 = vand.u32 2147483647, %v132
    %v230 = vand.u32 2147483647, %v133
    %vm231 = vcmp.lt.f32.partialorder %v227, 1.0
    %vm232 = vcmp.lt.f32.partialorder %v228, 1.0
    %vm233 = vcmp.lt.f32.partialorder %v229, 1.0
    %vm234 = vcmp.lt.f32.partialorder %v230, 1.0
    %v235 = vmul.f32 %v130, 0.5
    %v236 = vmul.f32 %v131, 0.5
    %v237 = vmul.f32 %v132, 0.5
    %v238 = vmul.f32 %v133, 0.5
    %v239 = vmul.f32 %v235, %v130
    %v240 = vmul.f32 %v236, %v131
    %v241 = vmul.f32 %v237, %v132
    %v242 = vmul.f32 %v238, %v133
    %v243 = vsub.f32 %v227, 0.5
    %v244 = vsub.f32 %v228, 0.5
    %v245 = vsub.f32 %v229, 0.5
    %v246 = vsub.f32 %v230, 0.5
    %v247 = vsel %vm231, %v239, %v243
    %v248 = vsel %vm232, %v240, %v244
    %v249 = vsel %vm233, %v241, %v245
    %v250 = vsel %vm234, %v242, %v246
    %v255 = vcombine.high %v247, %v247
    %v256 = vcombine.high %v248, %v248
    %v257 = vcombine.high %v249, %v249
    %v258 = vcombine.high %v250, %v250
    %v259 = vrot.slane %v247, 2
    %v260 = vrot.slane %v255, 2
    %v261 = vrot.slane %v248, 2
    %v262 = vrot.slane %v256, 2
    %v263 = vrot.slane %v249, 2
    %v264 = vrot.slane %v257, 2
    %v265 = vrot.slane %v250, 2
    %v266 = vrot.slane %v258, 2
    %v275 = vsel %vm170, %v259, 0.0
    %v276 = vrot.slane %v275, 4
    %v277 = vadd.f32 %v275, %v276
    %v278 = vrot.slane %v277, 2
    %v279 = vadd.f32 %v277, %v278
    %v280 = vrot.slane %v279, 1
    %v281 = vadd.f32 %v279, %v280
    %v282 = vsel %vm170, %v260, 0.0
    %v283 = vrot.slane %v282, 4
    %v284 = vadd.f32 %v282, %v283
    %v285 = vrot.slane %v284, 2
    %v286 = vadd.f32 %v284, %v285
    %v287 = vrot.slane %v286, 1
    %v288 = vadd.f32 %v286, %v287
    %v289 = vsel %vm170, %v261, 0.0
    %v290 = vrot.slane %v289, 4
    %v291 = vadd.f32 %v289, %v290
    %v292 = vrot.slane %v291, 2
    %v293 = vadd.f32 %v291, %v292
    %v294 = vrot.slane %v293, 1
    %v295 = vadd.f32 %v293, %v294
    %v296 = vsel %vm170, %v262, 0.0
    %v297 = vrot.slane %v296, 4
    %v298 = vadd.f32 %v296, %v297
    %v299 = vrot.slane %v298, 2
    %v300 = vadd.f32 %v298, %v299
    %v301 = vrot.slane %v300, 1
    %v302 = vadd.f32 %v300, %v301
    %v303 = vsel %vm170, %v263, 0.0
    %v304 = vrot.slane %v303, 4
    %v305 = vadd.f32 %v303, %v304
    %v306 = vrot.slane %v305, 2
    %v307 = vadd.f32 %v305, %v306
    %v308 = vrot.slane %v307, 1
    %v309 = vadd.f32 %v307, %v308
    %v310 = vsel %vm170, %v264, 0.0
    %v311 = vrot.slane %v310, 4
    %v312 = vadd.f32 %v310, %v311
    %v313 = vrot.slane %v312, 2
    %v314 = vadd.f32 %v312, %v313
    %v315 = vrot.slane %v314, 1
    %v316 = vadd.f32 %v314, %v315
    %v317 = vsel %vm170, %v265, 0.0
    %v318 = vrot.slane %v317, 4
    %v319 = vadd.f32 %v317, %v318
    %v320 = vrot.slane %v319, 2
    %v321 = vadd.f32 %v319, %v320
    %v322 = vrot.slane %v321, 1
    %v323 = vadd.f32 %v321, %v322
    %v324 = vsel %vm170, %v266, 0.0
    %v325 = vrot.slane %v324, 4
    %v326 = vadd.f32 %v324, %v325
    %v327 = vrot.slane %v326, 2
    %v328 = vadd.f32 %v326, %v327
    %v329 = vrot.slane %v328, 1
    %v330 = vadd.f32 %v328, %v329
    %v331 = vadd.f32 %v177, %v281
    %v332 = vadd.f32 %v184, %v288
    %v333 = vadd.f32 %v191, %v295
    %v334 = vadd.f32 %v198, %v302
    %v335 = vadd.f32 %v205, %v309
    %v336 = vadd.f32 %v212, %v316
    %v337 = vadd.f32 %v219, %v323
    %v338 = vadd.f32 %v226, %v330
    %vm339 = vcmp.gt.s32.totalorder %v91, 0
    %v340 = vsel %vm339, 1, 0
    %v341 = vcvt.s32.f32 %v340
    %v343 = vcombine.high %v341, %v341
    %vm345 = vcmask 1043456
    %v346 = vsel %vm345, %v341, 0.0
    %v347 = vsel %vm345, %v343, 0.0
    %v348 = vadd.f32 %v346, %v347
    %349 = vadd.xlane.f32.xlu0 %v348
    %v350 = vpop.xlane.xlu0 %349
    %v359 = vcombine.low %v331, %v332
    %v360 = vcombine.low %v333, %v334
    %v361 = vcombine.low %v335, %v336
    %v362 = vcombine.low %v337, %v338
    %v363 = vrot.slane %v360, 7
    %vm364 = vcmask 1041409
    %v365 = vsel %vm364, %v363, %v359
    %vm366 = vcmask 1045509
    %v367 = vsel %vm366, %v363, %v365
    %v368 = vrot.slane %v361, 6
    %vm369 = vcmask 1042434
    %v370 = vsel %vm369, %v368, %v367
    %vm371 = vcmask 1046534
    %v372 = vsel %vm371, %v368, %v370
    %v373 = vrot.slane %v362, 5
    %vm374 = vcmask 1043459
    %v375 = vsel %vm374, %v373, %v372
    %vm376 = vcmask 1047559
    %v377 = vsel %vm376, %v373, %v375
    %v379 = vmul.f32 %v341, %v377
    %v381 = vcombine.high %v379, %v379
    %v383 = vsel %vm345, %v379, 0.0
    %v384 = vsel %vm345, %v381, 0.0
    %v385 = vadd.f32 %v383, %v384
    %386 = vadd.xlane.f32.xlu0 %v385
    %v387 = vpop.xlane.xlu0 %386
    %v388 = vrot.slane %v83, 4
    %v389 = vmax.f32 %v83, %v388
    %v390 = vrot.slane %v389, 2
    %v391 = vmax.f32 %v389, %v390
    %v392 = vrot.slane %v391, 1
    %v393 = vmax.f32 %v391, %v392
    %v394 = vrot.slane %v84, 4
    %v395 = vmax.f32 %v84, %v394
    %v396 = vrot.slane %v395, 2
    %v397 = vmax.f32 %v395, %v396
    %v398 = vrot.slane %v397, 1
    %v399 = vmax.f32 %v397, %v398
    %v400 = vrot.slane %v85, 4
    %v401 = vmax.f32 %v85, %v400
    %v402 = vrot.slane %v401, 2
    %v403 = vmax.f32 %v401, %v402
    %v404 = vrot.slane %v403, 1
    %v405 = vmax.f32 %v403, %v404
    %v406 = vrot.slane %v86, 4
    %v407 = vmax.f32 %v86, %v406
    %v408 = vrot.slane %v407, 2
    %v409 = vmax.f32 %v407, %v408
    %v410 = vrot.slane %v409, 1
    %v411 = vmax.f32 %v409, %v410
    %v412 = vrot.slane %v87, 4
    %v413 = vmax.f32 %v87, %v412
    %v414 = vrot.slane %v413, 2
    %v415 = vmax.f32 %v413, %v414
    %v416 = vrot.slane %v415, 1
    %v417 = vmax.f32 %v415, %v416
    %v418 = vrot.slane %v88, 4
    %v419 = vmax.f32 %v88, %v418
    %v420 = vrot.slane %v419, 2
    %v421 = vmax.f32 %v419, %v420
    %v422 = vrot.slane %v421, 1
    %v423 = vmax.f32 %v421, %v422
    %v424 = vrot.slane %v89, 4
    %v425 = vmax.f32 %v89, %v424
    %v426 = vrot.slane %v425, 2
    %v427 = vmax.f32 %v425, %v426
    %v428 = vrot.slane %v427, 1
    %v429 = vmax.f32 %v427, %v428
    %v430 = vrot.slane %v90, 4
    %v431 = vmax.f32 %v90, %v430
    %v432 = vrot.slane %v431, 2
    %v433 = vmax.f32 %v431, %v432
    %v434 = vrot.slane %v433, 1
    %v435 = vmax.f32 %v433, %v434
    %v436 = vsub.f32 %v83, %v393
    %v437 = vsub.f32 %v84, %v399
    %v438 = vsub.f32 %v85, %v405
    %v439 = vsub.f32 %v86, %v411
    %v440 = vsub.f32 %v87, %v417
    %v441 = vsub.f32 %v88, %v423
    %v442 = vsub.f32 %v89, %v429
    %v443 = vsub.f32 %v90, %v435
    %v444 = vmul.f32 %v436, 1.442695
    %v445 = vpow.pop %v444
    %v446 = vmul.f32 %v437, 1.442695
    %v447 = vpow.pop %v446
    %v448 = vmul.f32 %v438, 1.442695
    %v449 = vpow.pop %v448
    %v450 = vmul.f32 %v439, 1.442695
    %v451 = vpow.pop %v450
    %v452 = vmul.f32 %v440, 1.442695
    %v453 = vpow.pop %v452
    %v454 = vmul.f32 %v441, 1.442695
    %v455 = vpow.pop %v454
    %v456 = vmul.f32 %v442, 1.442695
    %v457 = vpow.pop %v456
    %v458 = vmul.f32 %v443, 1.442695
    %v459 = vpow.pop %v458
    %v460 = vrot.slane %v445, 4
    %v461 = vadd.f32 %v445, %v460
    %v462 = vrot.slane %v461, 2
    %v463 = vadd.f32 %v461, %v462
    %v464 = vrot.slane %v463, 1
    %v465 = vadd.f32 %v463, %v464
    %v466 = vrot.slane %v447, 4
    %v467 = vadd.f32 %v447, %v466
    %v468 = vrot.slane %v467, 2
    %v469 = vadd.f32 %v467, %v468
    %v470 = vrot.slane %v469, 1
    %v471 = vadd.f32 %v469, %v470
    %v472 = vrot.slane %v449, 4
    %v473 = vadd.f32 %v449, %v472
    %v474 = vrot.slane %v473, 2
    %v475 = vadd.f32 %v473, %v474
    %v476 = vrot.slane %v475, 1
    %v477 = vadd.f32 %v475, %v476
    %v478 = vrot.slane %v451, 4
    %v479 = vadd.f32 %v451, %v478
    %v480 = vrot.slane %v479, 2
    %v481 = vadd.f32 %v479, %v480
    %v482 = vrot.slane %v481, 1
    %v483 = vadd.f32 %v481, %v482
    %v484 = vrot.slane %v453, 4
    %v485 = vadd.f32 %v453, %v484
    %v486 = vrot.slane %v485, 2
    %v487 = vadd.f32 %v485, %v486
    %v488 = vrot.slane %v487, 1
    %v489 = vadd.f32 %v487, %v488
    %v490 = vrot.slane %v455, 4
    %v491 = vadd.f32 %v455, %v490
    %v492 = vrot.slane %v491, 2
    %v493 = vadd.f32 %v491, %v492
    %v494 = vrot.slane %v493, 1
    %v495 = vadd.f32 %v493, %v494
    %v496 = vrot.slane %v457, 4
    %v497 = vadd.f32 %v457, %v496
    %v498 = vrot.slane %v497, 2
    %v499 = vadd.f32 %v497, %v498
    %v500 = vrot.slane %v499, 1
    %v501 = vadd.f32 %v499, %v500
    %v502 = vrot.slane %v459, 4
    %v503 = vadd.f32 %v459, %v502
    %v504 = vrot.slane %v503, 2
    %v505 = vadd.f32 %v503, %v504
    %v506 = vrot.slane %v505, 1
    %v507 = vadd.f32 %v505, %v506
    %v508 = vlog2.pop %v465
    %v509 = vmul.f32 %v508, 0.6931472
    %v510 = vlog2.pop %v471
    %v511 = vmul.f32 %v510, 0.6931472
    %v512 = vlog2.pop %v477
    %v513 = vmul.f32 %v512, 0.6931472
    %v514 = vlog2.pop %v483
    %v515 = vmul.f32 %v514, 0.6931472
    %v516 = vlog2.pop %v489
    %v517 = vmul.f32 %v516, 0.6931472
    %v518 = vlog2.pop %v495
    %v519 = vmul.f32 %v518, 0.6931472
    %v520 = vlog2.pop %v501
    %v521 = vmul.f32 %v520, 0.6931472
    %v522 = vlog2.pop %v507
    %v523 = vmul.f32 %v522, 0.6931472
    %v524 = vadd.f32 %v393, %v509
    %v525 = vadd.f32 %v399, %v511
    %v526 = vadd.f32 %v405, %v513
    %v527 = vadd.f32 %v411, %v515
    %v528 = vadd.f32 %v417, %v517
    %v529 = vadd.f32 %v423, %v519
    %v530 = vadd.f32 %v429, %v521
    %v531 = vadd.f32 %v435, %v523
    %v532 = vlaneseq
    %v533 = vshrl.u32 %v532, 7
    %v535 = vunpack.c.l.s4 1966171168
    %v536 = vunpack.c.0.s8 %v535
    %v537 = vlaneseq
    %v538 = vshrl.u32 %v537, 7
    %v539 = vsub.s32 %v536, %v538
    %v540 = vrot.slane %v91, %v539
    %v541 = vcombine.high %v540, %v540
    %v543 = vunpack.c.l.s4 1966171168
    %v544 = vunpack.c.0.s8 %v543
    %v545 = vlaneseq
    %v546 = vshrl.u32 %v545, 7
    %v547 = vsub.s32 %v544, %v546
    %v548 = vrot.slane %v540, %v547
    %v550 = vunpack.c.l.s4 1966171168
    %v551 = vunpack.c.0.s8 %v550
    %v552 = vlaneseq
    %v553 = vshrl.u32 %v552, 7
    %v554 = vsub.s32 %v551, %v553
    %v555 = vrot.slane %v541, %v554
    %v556 = vcombine.high %v548, %v548
    %v557 = vcombine.high %v555, %v555
    %v558 = vlaneseq
    %v559 = vshrl.u32 %v558, 7
    %v560 = vsub.s32 0, %v559
    %v561 = vrot.slane %v548, %v560
    %v562 = vlaneseq
    %v563 = vshrl.u32 %v562, 7
    %v564 = vsub.s32 1, %v563
    %v565 = vrot.slane %v548, %v564
    %v566 = vlaneseq
    %v567 = vshrl.u32 %v566, 7
    %v568 = vsub.s32 0, %v567
    %v569 = vrot.slane %v555, %v568
    %v570 = vlaneseq
    %v571 = vshrl.u32 %v570, 7
    %v572 = vsub.s32 1, %v571
    %v573 = vrot.slane %v555, %v572
    %v574 = vlaneseq
    %v575 = vshrl.u32 %v574, 7
    %v576 = vsub.s32 0, %v575
    %v577 = vrot.slane %v556, %v576
    %v578 = vlaneseq
    %v579 = vshrl.u32 %v578, 7
    %v580 = vsub.s32 1, %v579
    %v581 = vrot.slane %v556, %v580
    %v582 = vlaneseq
    %v583 = vshrl.u32 %v582, 7
    %v584 = vsub.s32 0, %v583
    %v585 = vrot.slane %v557, %v584
    %v586 = vlaneseq
    %v587 = vshrl.u32 %v586, 7
    %v588 = vsub.s32 1, %v587
    %v589 = vrot.slane %v557, %v588
    %vm590 = vcmp.eq.s32.totalorder %v533, %v561
    %vm591 = vcmp.eq.s32.totalorder %v533, %v565
    %vm592 = vcmp.eq.s32.totalorder %v533, %v569
    %vm593 = vcmp.eq.s32.totalorder %v533, %v573
    %vm594 = vcmp.eq.s32.totalorder %v533, %v577
    %vm595 = vcmp.eq.s32.totalorder %v533, %v581
    %vm596 = vcmp.eq.s32.totalorder %v533, %v585
    %vm597 = vcmp.eq.s32.totalorder %v533, %v589
    %v598 = vsel %vm590, 1, 0
    %v599 = vsel %vm591, 1, 0
    %v600 = vsel %vm592, 1, 0
    %v601 = vsel %vm593, 1, 0
    %v602 = vsel %vm594, 1, 0
    %v603 = vsel %vm595, 1, 0
    %v604 = vsel %vm596, 1, 0
    %v605 = vsel %vm597, 1, 0
    %v606 = vcvt.s32.f32 %v598
    %v607 = vcvt.s32.f32 %v599
    %v608 = vcvt.s32.f32 %v600
    %v609 = vcvt.s32.f32 %v601
    %v610 = vcvt.s32.f32 %v602
    %v611 = vcvt.s32.f32 %v603
    %v612 = vcvt.s32.f32 %v604
    %v613 = vcvt.s32.f32 %v605
    %v614 = vmul.f32 %v83, %v606
    %v615 = vmul.f32 %v84, %v607
    %v616 = vmul.f32 %v85, %v608
    %v617 = vmul.f32 %v86, %v609
    %v618 = vmul.f32 %v87, %v610
    %v619 = vmul.f32 %v88, %v611
    %v620 = vmul.f32 %v89, %v612
    %v621 = vmul.f32 %v90, %v613
    %v622 = vrot.slane %v614, 4
    %v623 = vadd.f32 %v614, %v622
    %v624 = vrot.slane %v623, 2
    %v625 = vadd.f32 %v623, %v624
    %v626 = vrot.slane %v625, 1
    %v627 = vadd.f32 %v625, %v626
    %v628 = vrot.slane %v615, 4
    %v629 = vadd.f32 %v615, %v628
    %v630 = vrot.slane %v629, 2
    %v631 = vadd.f32 %v629, %v630
    %v632 = vrot.slane %v631, 1
    %v633 = vadd.f32 %v631, %v632
    %v634 = vrot.slane %v616, 4
    %v635 = vadd.f32 %v616, %v634
    %v636 = vrot.slane %v635, 2
    %v637 = vadd.f32 %v635, %v636
    %v638 = vrot.slane %v637, 1
    %v639 = vadd.f32 %v637, %v638
    %v640 = vrot.slane %v617, 4
    %v641 = vadd.f32 %v617, %v640
    %v642 = vrot.slane %v641, 2
    %v643 = vadd.f32 %v641, %v642
    %v644 = vrot.slane %v643, 1
    %v645 = vadd.f32 %v643, %v644
    %v646 = vrot.slane %v618, 4
    %v647 = vadd.f32 %v618, %v646
    %v648 = vrot.slane %v647, 2
    %v649 = vadd.f32 %v647, %v648
    %v650 = vrot.slane %v649, 1
    %v651 = vadd.f32 %v649, %v650
    %v652 = vrot.slane %v619, 4
    %v653 = vadd.f32 %v619, %v652
    %v654 = vrot.slane %v653, 2
    %v655 = vadd.f32 %v653, %v654
    %v656 = vrot.slane %v655, 1
    %v657 = vadd.f32 %v655, %v656
    %v658 = vrot.slane %v620, 4
    %v659 = vadd.f32 %v620, %v658
    %v660 = vrot.slane %v659, 2
    %v661 = vadd.f32 %v659, %v660
    %v662 = vrot.slane %v661, 1
    %v663 = vadd.f32 %v661, %v662
    %v664 = vrot.slane %v621, 4
    %v665 = vadd.f32 %v621, %v664
    %v666 = vrot.slane %v665, 2
    %v667 = vadd.f32 %v665, %v666
    %v668 = vrot.slane %v667, 1
    %v669 = vadd.f32 %v667, %v668
    %v670 = vsub.f32 %v524, %v627
    %v671 = vsub.f32 %v525, %v633
    %v672 = vsub.f32 %v526, %v639
    %v673 = vsub.f32 %v527, %v645
    %v674 = vsub.f32 %v528, %v651
    %v675 = vsub.f32 %v529, %v657
    %v676 = vsub.f32 %v530, %v663
    %v677 = vsub.f32 %v531, %v669
    %v686 = vcombine.low %v670, %v671
    %v687 = vcombine.low %v672, %v673
    %v688 = vcombine.low %v674, %v675
    %v689 = vcombine.low %v676, %v677
    %v690 = vrot.slane %v687, 7
    %v691 = vsel %vm364, %v690, %v686
    %v692 = vsel %vm366, %v690, %v691
    %v693 = vrot.slane %v688, 6
    %v694 = vsel %vm369, %v693, %v692
    %v695 = vsel %vm371, %v693, %v694
    %v696 = vrot.slane %v689, 5
    %v697 = vsel %vm374, %v696, %v695
    %v698 = vsel %vm376, %v696, %v697
    %v700 = vsel %vm339, 0.0, %v698
    %vm701 = vcmp.ne.f32.partialorder %v700, %v700
    %v702 = vsel %vm701, 0.0, %v700
    %v703 = vmul.f32 %v350, 3.0
    %v704 = vmin.f32 %v703, 256.0
    %v706 = vcombine.high %v702, %v702
    %v708 = vsel %vm345, %v702, -inf
    %v709 = vsel %vm345, %v706, -inf
    %v710 = vmax.f32 %v708, %v709
    %711 = vmax.xlane.f32.xlu0 %v710
    %v712 = vpop.xlane.xlu0 %711
    %v713 = vadd.f32 %v712, -1.0
    %v714 = vmul.f32 %v713, 0.5
    %v717 = vunpack.c.l.s4 839922192
    %v718 = vunpack.c.0.s8 %v717
    %v719 = vlaneseq
    %v720 = vshrl.u32 %v719, 7
    %v721 = vsub.s32 %v718, %v720
    %v722 = vrot.slane %v714, %v721
    %vm724 = vcmp.gt.f32.partialorder %v702, %v722
    %v725 = vsel %vm724, 1, 0
    %v726 = vcvt.s32.f32 %v725
    %v728 = vcombine.high %v726, %v726
    %v730 = vsel %vm345, %v726, 0.0
    %v731 = vsel %vm345, %v728, 0.0
    %v732 = vadd.f32 %v730, %v731
    %733 = vadd.xlane.f32.xlu0 %v732
    %v734 = vpop.xlane.xlu0 %733
    %vm735 = vcmp.ge.f32.partialorder %v734, %v704
    %v736 = vsel %vm735, %v714, -1.0
    %v737 = vsel %vm735, %v712, %v714
    %v738 = vadd.f32 %v736, %v737
    %v739 = vmul.f32 %v738, 0.5
    %v742 = vunpack.c.l.s4 839922192
    %v743 = vunpack.c.0.s8 %v742
    %v744 = vlaneseq
    %v745 = vshrl.u32 %v744, 7
    %v746 = vsub.s32 %v743, %v745
    %v747 = vrot.slane %v739, %v746
    %vm749 = vcmp.gt.f32.partialorder %v702, %v747
    %v750 = vsel %vm749, 1, 0
    %v751 = vcvt.s32.f32 %v750
    %v753 = vcombine.high %v751, %v751
    %v755 = vsel %vm345, %v751, 0.0
    %v756 = vsel %vm345, %v753, 0.0
    %v757 = vadd.f32 %v755, %v756
    %758 = vadd.xlane.f32.xlu0 %v757
    %v759 = vpop.xlane.xlu0 %758
    %vm760 = vcmp.ge.f32.partialorder %v759, %v704
    %v761 = vsel %vm760, %v739, %v736
    %v762 = vsel %vm760, %v737, %v739
    %v763 = vadd.f32 %v761, %v762
    %v764 = vmul.f32 %v763, 0.5
    %v767 = vunpack.c.l.s4 839922192
    %v768 = vunpack.c.0.s8 %v767
    %v769 = vlaneseq
    %v770 = vshrl.u32 %v769, 7
    %v771 = vsub.s32 %v768, %v770
    %v772 = vrot.slane %v764, %v771
    %vm774 = vcmp.gt.f32.partialorder %v702, %v772
    %v775 = vsel %vm774, 1, 0
    %v776 = vcvt.s32.f32 %v775
    %v778 = vcombine.high %v776, %v776
    %v780 = vsel %vm345, %v776, 0.0
    %v781 = vsel %vm345, %v778, 0.0
    %v782 = vadd.f32 %v780, %v781
    %783 = vadd.xlane.f32.xlu0 %v782
    %v784 = vpop.xlane.xlu0 %783
    %vm785 = vcmp.ge.f32.partialorder %v784, %v704
    %v786 = vsel %vm785, %v764, %v761
    %v787 = vsel %vm785, %v762, %v764
    %v788 = vadd.f32 %v786, %v787
    %v789 = vmul.f32 %v788, 0.5
    %v792 = vunpack.c.l.s4 839922192
    %v793 = vunpack.c.0.s8 %v792
    %v794 = vlaneseq
    %v795 = vshrl.u32 %v794, 7
    %v796 = vsub.s32 %v793, %v795
    %v797 = vrot.slane %v789, %v796
    %vm799 = vcmp.gt.f32.partialorder %v702, %v797
    %v800 = vsel %vm799, 1, 0
    %v801 = vcvt.s32.f32 %v800
    %v803 = vcombine.high %v801, %v801
    %v805 = vsel %vm345, %v801, 0.0
    %v806 = vsel %vm345, %v803, 0.0
    %v807 = vadd.f32 %v805, %v806
    %808 = vadd.xlane.f32.xlu0 %v807
    %v809 = vpop.xlane.xlu0 %808
    %vm810 = vcmp.ge.f32.partialorder %v809, %v704
    %v811 = vsel %vm810, %v789, %v786
    %v812 = vsel %vm810, %v787, %v789
    %v813 = vadd.f32 %v811, %v812
    %v814 = vmul.f32 %v813, 0.5
    %v817 = vunpack.c.l.s4 839922192
    %v818 = vunpack.c.0.s8 %v817
    %v819 = vlaneseq
    %v820 = vshrl.u32 %v819, 7
    %v821 = vsub.s32 %v818, %v820
    %v822 = vrot.slane %v814, %v821
    %vm824 = vcmp.gt.f32.partialorder %v702, %v822
    %v825 = vsel %vm824, 1, 0
    %v826 = vcvt.s32.f32 %v825
    %v828 = vcombine.high %v826, %v826
    %v830 = vsel %vm345, %v826, 0.0
    %v831 = vsel %vm345, %v828, 0.0
    %v832 = vadd.f32 %v830, %v831
    %833 = vadd.xlane.f32.xlu0 %v832
    %v834 = vpop.xlane.xlu0 %833
    %vm835 = vcmp.ge.f32.partialorder %v834, %v704
    %v836 = vsel %vm835, %v814, %v811
    %v837 = vsel %vm835, %v812, %v814
    %v838 = vadd.f32 %v836, %v837
    %v839 = vmul.f32 %v838, 0.5
    %v842 = vunpack.c.l.s4 839922192
    %v843 = vunpack.c.0.s8 %v842
    %v844 = vlaneseq
    %v845 = vshrl.u32 %v844, 7
    %v846 = vsub.s32 %v843, %v845
    %v847 = vrot.slane %v839, %v846
    %vm849 = vcmp.gt.f32.partialorder %v702, %v847
    %v850 = vsel %vm849, 1, 0
    %v851 = vcvt.s32.f32 %v850
    %v853 = vcombine.high %v851, %v851
    %v855 = vsel %vm345, %v851, 0.0
    %v856 = vsel %vm345, %v853, 0.0
    %v857 = vadd.f32 %v855, %v856
    %858 = vadd.xlane.f32.xlu0 %v857
    %v859 = vpop.xlane.xlu0 %858
    %vm860 = vcmp.ge.f32.partialorder %v859, %v704
    %v861 = vsel %vm860, %v839, %v836
    %v862 = vsel %vm860, %v837, %v839
    %v863 = vadd.f32 %v861, %v862
    %v864 = vmul.f32 %v863, 0.5
    %v867 = vunpack.c.l.s4 839922192
    %v868 = vunpack.c.0.s8 %v867
    %v869 = vlaneseq
    %v870 = vshrl.u32 %v869, 7
    %v871 = vsub.s32 %v868, %v870
    %v872 = vrot.slane %v864, %v871
    %vm874 = vcmp.gt.f32.partialorder %v702, %v872
    %v875 = vsel %vm874, 1, 0
    %v876 = vcvt.s32.f32 %v875
    %v878 = vcombine.high %v876, %v876
    %v880 = vsel %vm345, %v876, 0.0
    %v881 = vsel %vm345, %v878, 0.0
    %v882 = vadd.f32 %v880, %v881
    %883 = vadd.xlane.f32.xlu0 %v882
    %v884 = vpop.xlane.xlu0 %883
    %vm885 = vcmp.ge.f32.partialorder %v884, %v704
    %v886 = vsel %vm885, %v864, %v861
    %v887 = vsel %vm885, %v862, %v864
    %v888 = vadd.f32 %v886, %v887
    %v889 = vmul.f32 %v888, 0.5
    %v892 = vunpack.c.l.s4 839922192
    %v893 = vunpack.c.0.s8 %v892
    %v894 = vlaneseq
    %v895 = vshrl.u32 %v894, 7
    %v896 = vsub.s32 %v893, %v895
    %v897 = vrot.slane %v889, %v896
    %vm899 = vcmp.gt.f32.partialorder %v702, %v897
    %v900 = vsel %vm899, 1, 0
    %v901 = vcvt.s32.f32 %v900
    %v903 = vcombine.high %v901, %v901
    %v905 = vsel %vm345, %v901, 0.0
    %v906 = vsel %vm345, %v903, 0.0
    %v907 = vadd.f32 %v905, %v906
    %908 = vadd.xlane.f32.xlu0 %v907
    %v909 = vpop.xlane.xlu0 %908
    %vm910 = vcmp.ge.f32.partialorder %v909, %v704
    %v911 = vsel %vm910, %v889, %v886
    %v912 = vsel %vm910, %v887, %v889
    %v913 = vadd.f32 %v911, %v912
    %v914 = vmul.f32 %v913, 0.5
    %v917 = vunpack.c.l.s4 839922192
    %v918 = vunpack.c.0.s8 %v917
    %v919 = vlaneseq
    %v920 = vshrl.u32 %v919, 7
    %v921 = vsub.s32 %v918, %v920
    %v922 = vrot.slane %v914, %v921
    %vm924 = vcmp.gt.f32.partialorder %v702, %v922
    %v925 = vsel %vm924, 1, 0
    %v926 = vcvt.s32.f32 %v925
    %v928 = vcombine.high %v926, %v926
    %v930 = vsel %vm345, %v926, 0.0
    %v931 = vsel %vm345, %v928, 0.0
    %v932 = vadd.f32 %v930, %v931
    %933 = vadd.xlane.f32.xlu0 %v932
    %v934 = vpop.xlane.xlu0 %933
    %vm935 = vcmp.ge.f32.partialorder %v934, %v704
    %v936 = vsel %vm935, %v914, %v911
    %v937 = vsel %vm935, %v912, %v914
    %v938 = vadd.f32 %v936, %v937
    %v939 = vmul.f32 %v938, 0.5
    %v942 = vunpack.c.l.s4 839922192
    %v943 = vunpack.c.0.s8 %v942
    %v944 = vlaneseq
    %v945 = vshrl.u32 %v944, 7
    %v946 = vsub.s32 %v943, %v945
    %v947 = vrot.slane %v939, %v946
    %vm949 = vcmp.gt.f32.partialorder %v702, %v947
    %v950 = vsel %vm949, 1, 0
    %v951 = vcvt.s32.f32 %v950
    %v953 = vcombine.high %v951, %v951
    %v955 = vsel %vm345, %v951, 0.0
    %v956 = vsel %vm345, %v953, 0.0
    %v957 = vadd.f32 %v955, %v956
    %958 = vadd.xlane.f32.xlu0 %v957
    %v959 = vpop.xlane.xlu0 %958
    %vm960 = vcmp.ge.f32.partialorder %v959, %v704
    %v961 = vsel %vm960, %v939, %v936
    %v962 = vsel %vm960, %v937, %v939
    %v963 = vadd.f32 %v961, %v962
    %v964 = vmul.f32 %v963, 0.5
    %v967 = vunpack.c.l.s4 839922192
    %v968 = vunpack.c.0.s8 %v967
    %v969 = vlaneseq
    %v970 = vshrl.u32 %v969, 7
    %v971 = vsub.s32 %v968, %v970
    %v972 = vrot.slane %v964, %v971
    %vm974 = vcmp.gt.f32.partialorder %v702, %v972
    %v975 = vsel %vm974, 1, 0
    %v976 = vcvt.s32.f32 %v975
    %v978 = vcombine.high %v976, %v976
    %v980 = vsel %vm345, %v976, 0.0
    %v981 = vsel %vm345, %v978, 0.0
    %v982 = vadd.f32 %v980, %v981
    %983 = vadd.xlane.f32.xlu0 %v982
    %v984 = vpop.xlane.xlu0 %983
    %vm985 = vcmp.ge.f32.partialorder %v984, %v704
    %v986 = vsel %vm985, %v964, %v961
    %v987 = vsel %vm985, %v962, %v964
    %v988 = vadd.f32 %v986, %v987
    %v989 = vmul.f32 %v988, 0.5
    %v992 = vunpack.c.l.s4 839922192
    %v993 = vunpack.c.0.s8 %v992
    %v994 = vlaneseq
    %v995 = vshrl.u32 %v994, 7
    %v996 = vsub.s32 %v993, %v995
    %v997 = vrot.slane %v989, %v996
    %vm999 = vcmp.gt.f32.partialorder %v702, %v997
    %v1000 = vsel %vm999, 1, 0
    %v1001 = vcvt.s32.f32 %v1000
    %v1003 = vcombine.high %v1001, %v1001
    %v1005 = vsel %vm345, %v1001, 0.0
    %v1006 = vsel %vm345, %v1003, 0.0
    %v1007 = vadd.f32 %v1005, %v1006
    %1008 = vadd.xlane.f32.xlu0 %v1007
    %v1009 = vpop.xlane.xlu0 %1008
    %vm1010 = vcmp.ge.f32.partialorder %v1009, %v704
    %v1011 = vsel %vm1010, %v989, %v986
    %v1012 = vsel %vm1010, %v987, %v989
    %v1013 = vadd.f32 %v1011, %v1012
    %v1014 = vmul.f32 %v1013, 0.5
    %v1017 = vunpack.c.l.s4 839922192
    %v1018 = vunpack.c.0.s8 %v1017
    %v1019 = vlaneseq
    %v1020 = vshrl.u32 %v1019, 7
    %v1021 = vsub.s32 %v1018, %v1020
    %v1022 = vrot.slane %v1014, %v1021
    %vm1024 = vcmp.gt.f32.partialorder %v702, %v1022
    %v1025 = vsel %vm1024, 1, 0
    %v1026 = vcvt.s32.f32 %v1025
    %v1028 = vcombine.high %v1026, %v1026
    %v1030 = vsel %vm345, %v1026, 0.0
    %v1031 = vsel %vm345, %v1028, 0.0
    %v1032 = vadd.f32 %v1030, %v1031
    %1033 = vadd.xlane.f32.xlu0 %v1032
    %v1034 = vpop.xlane.xlu0 %1033
    %vm1035 = vcmp.ge.f32.partialorder %v1034, %v704
    %v1036 = vsel %vm1035, %v1014, %v1011
    %v1037 = vsel %vm1035, %v1012, %v1014
    %v1038 = vadd.f32 %v1036, %v1037
    %v1039 = vmul.f32 %v1038, 0.5
    %v1042 = vunpack.c.l.s4 839922192
    %v1043 = vunpack.c.0.s8 %v1042
    %v1044 = vlaneseq
    %v1045 = vshrl.u32 %v1044, 7
    %v1046 = vsub.s32 %v1043, %v1045
    %v1047 = vrot.slane %v1039, %v1046
    %vm1049 = vcmp.gt.f32.partialorder %v702, %v1047
    %v1050 = vsel %vm1049, 1, 0
    %v1051 = vcvt.s32.f32 %v1050
    %v1053 = vcombine.high %v1051, %v1051
    %v1055 = vsel %vm345, %v1051, 0.0
    %v1056 = vsel %vm345, %v1053, 0.0
    %v1057 = vadd.f32 %v1055, %v1056
    %1058 = vadd.xlane.f32.xlu0 %v1057
    %v1059 = vpop.xlane.xlu0 %1058
    %vm1060 = vcmp.ge.f32.partialorder %v1059, %v704
    %v1061 = vsel %vm1060, %v1039, %v1036
    %v1062 = vsel %vm1060, %v1037, %v1039
    %v1063 = vadd.f32 %v1061, %v1062
    %v1064 = vmul.f32 %v1063, 0.5
    %v1067 = vunpack.c.l.s4 839922192
    %v1068 = vunpack.c.0.s8 %v1067
    %v1069 = vlaneseq
    %v1070 = vshrl.u32 %v1069, 7
    %v1071 = vsub.s32 %v1068, %v1070
    %v1072 = vrot.slane %v1064, %v1071
    %vm1074 = vcmp.gt.f32.partialorder %v702, %v1072
    %v1075 = vsel %vm1074, 1, 0
    %v1076 = vcvt.s32.f32 %v1075
    %v1078 = vcombine.high %v1076, %v1076
    %v1080 = vsel %vm345, %v1076, 0.0
    %v1081 = vsel %vm345, %v1078, 0.0
    %v1082 = vadd.f32 %v1080, %v1081
    %1083 = vadd.xlane.f32.xlu0 %v1082
    %v1084 = vpop.xlane.xlu0 %1083
    %vm1085 = vcmp.ge.f32.partialorder %v1084, %v704
    %v1086 = vsel %vm1085, %v1064, %v1061
    %v1087 = vsel %vm1085, %v1062, %v1064
    %v1088 = vadd.f32 %v1086, %v1087
    %v1089 = vmul.f32 %v1088, 0.5
    %v1092 = vunpack.c.l.s4 839922192
    %v1093 = vunpack.c.0.s8 %v1092
    %v1094 = vlaneseq
    %v1095 = vshrl.u32 %v1094, 7
    %v1096 = vsub.s32 %v1093, %v1095
    %v1097 = vrot.slane %v1089, %v1096
    %vm1099 = vcmp.gt.f32.partialorder %v702, %v1097
    %v1100 = vsel %vm1099, 1, 0
    %v1101 = vcvt.s32.f32 %v1100
    %v1103 = vcombine.high %v1101, %v1101
    %v1105 = vsel %vm345, %v1101, 0.0
    %v1106 = vsel %vm345, %v1103, 0.0
    %v1107 = vadd.f32 %v1105, %v1106
    %1108 = vadd.xlane.f32.xlu0 %v1107
    %v1109 = vpop.xlane.xlu0 %1108
    %vm1110 = vcmp.ge.f32.partialorder %v1109, %v704
    %v1111 = vsel %vm1110, %v1089, %v1086
    %v1112 = vsel %vm1110, %v1087, %v1089
    %v1113 = vadd.f32 %v1111, %v1112
    %v1114 = vmul.f32 %v1113, 0.5
    %v1117 = vunpack.c.l.s4 839922192
    %v1118 = vunpack.c.0.s8 %v1117
    %v1119 = vlaneseq
    %v1120 = vshrl.u32 %v1119, 7
    %v1121 = vsub.s32 %v1118, %v1120
    %v1122 = vrot.slane %v1114, %v1121
    %vm1124 = vcmp.gt.f32.partialorder %v702, %v1122
    %v1125 = vsel %vm1124, 1, 0
    %v1126 = vcvt.s32.f32 %v1125
    %v1128 = vcombine.high %v1126, %v1126
    %v1130 = vsel %vm345, %v1126, 0.0
    %v1131 = vsel %vm345, %v1128, 0.0
    %v1132 = vadd.f32 %v1130, %v1131
    %1133 = vadd.xlane.f32.xlu0 %v1132
    %v1134 = vpop.xlane.xlu0 %1133
    %vm1135 = vcmp.ge.f32.partialorder %v1134, %v704
    %v1136 = vsel %vm1135, %v1114, %v1111
    %v1137 = vsel %vm1135, %v1112, %v1114
    %v1138 = vadd.f32 %v1136, %v1137
    %v1139 = vmul.f32 %v1138, 0.5
    %v1142 = vunpack.c.l.s4 839922192
    %v1143 = vunpack.c.0.s8 %v1142
    %v1144 = vlaneseq
    %v1145 = vshrl.u32 %v1144, 7
    %v1146 = vsub.s32 %v1143, %v1145
    %v1147 = vrot.slane %v1139, %v1146
    %vm1149 = vcmp.gt.f32.partialorder %v702, %v1147
    %v1150 = vsel %vm1149, 1, 0
    %v1151 = vcvt.s32.f32 %v1150
    %v1153 = vcombine.high %v1151, %v1151
    %v1155 = vsel %vm345, %v1151, 0.0
    %v1156 = vsel %vm345, %v1153, 0.0
    %v1157 = vadd.f32 %v1155, %v1156
    %1158 = vadd.xlane.f32.xlu0 %v1157
    %v1159 = vpop.xlane.xlu0 %1158
    %vm1160 = vcmp.ge.f32.partialorder %v1159, %v704
    %v1161 = vsel %vm1160, %v1139, %v1136
    %v1162 = vsel %vm1160, %v1137, %v1139
    %v1163 = vadd.f32 %v1161, %v1162
    %v1164 = vmul.f32 %v1163, 0.5
    %v1167 = vunpack.c.l.s4 839922192
    %v1168 = vunpack.c.0.s8 %v1167
    %v1169 = vlaneseq
    %v1170 = vshrl.u32 %v1169, 7
    %v1171 = vsub.s32 %v1168, %v1170
    %v1172 = vrot.slane %v1164, %v1171
    %vm1174 = vcmp.gt.f32.partialorder %v702, %v1172
    %v1175 = vsel %vm1174, 1, 0
    %v1176 = vcvt.s32.f32 %v1175
    %v1178 = vcombine.high %v1176, %v1176
    %v1180 = vsel %vm345, %v1176, 0.0
    %v1181 = vsel %vm345, %v1178, 0.0
    %v1182 = vadd.f32 %v1180, %v1181
    %1183 = vadd.xlane.f32.xlu0 %v1182
    %v1184 = vpop.xlane.xlu0 %1183
    %vm1185 = vcmp.ge.f32.partialorder %v1184, %v704
    %v1186 = vsel %vm1185, %v1164, %v1161
    %v1187 = vsel %vm1185, %v1162, %v1164
    %v1188 = vadd.f32 %v1186, %v1187
    %v1189 = vmul.f32 %v1188, 0.5
    %v1192 = vunpack.c.l.s4 839922192
    %v1193 = vunpack.c.0.s8 %v1192
    %v1194 = vlaneseq
    %v1195 = vshrl.u32 %v1194, 7
    %v1196 = vsub.s32 %v1193, %v1195
    %v1197 = vrot.slane %v1189, %v1196
    %vm1199 = vcmp.gt.f32.partialorder %v702, %v1197
    %v1200 = vsel %vm1199, 1, 0
    %v1201 = vcvt.s32.f32 %v1200
    %v1203 = vcombine.high %v1201, %v1201
    %v1205 = vsel %vm345, %v1201, 0.0
    %v1206 = vsel %vm345, %v1203, 0.0
    %v1207 = vadd.f32 %v1205, %v1206
    %1208 = vadd.xlane.f32.xlu0 %v1207
    %v1209 = vpop.xlane.xlu0 %1208
    %vm1210 = vcmp.ge.f32.partialorder %v1209, %v704
    %v1211 = vsel %vm1210, %v1189, %v1186
    %v1212 = vsel %vm1210, %v1187, %v1189
    %v1213 = vadd.f32 %v1211, %v1212
    %v1214 = vmul.f32 %v1213, 0.5
    %v1217 = vunpack.c.l.s4 839922192
    %v1218 = vunpack.c.0.s8 %v1217
    %v1219 = vlaneseq
    %v1220 = vshrl.u32 %v1219, 7
    %v1221 = vsub.s32 %v1218, %v1220
    %v1222 = vrot.slane %v1214, %v1221
    %vm1224 = vcmp.gt.f32.partialorder %v702, %v1222
    %v1225 = vsel %vm1224, 1, 0
    %v1226 = vcvt.s32.f32 %v1225
    %v1228 = vcombine.high %v1226, %v1226
    %v1230 = vsel %vm345, %v1226, 0.0
    %v1231 = vsel %vm345, %v1228, 0.0
    %v1232 = vadd.f32 %v1230, %v1231
    %1233 = vadd.xlane.f32.xlu0 %v1232
    %v1234 = vpop.xlane.xlu0 %1233
    %vm1235 = vcmp.ge.f32.partialorder %v1234, %v704
    %v1236 = vsel %vm1235, %v1214, %v1211
    %v1237 = vsel %vm1235, %v1212, %v1214
    %v1238 = vadd.f32 %v1236, %v1237
    %v1239 = vmul.f32 %v1238, 0.5
    %v1242 = vunpack.c.l.s4 839922192
    %v1243 = vunpack.c.0.s8 %v1242
    %v1244 = vlaneseq
    %v1245 = vshrl.u32 %v1244, 7
    %v1246 = vsub.s32 %v1243, %v1245
    %v1247 = vrot.slane %v1239, %v1246
    %vm1249 = vcmp.gt.f32.partialorder %v702, %v1247
    %v1250 = vsel %vm1249, 1, 0
    %v1251 = vcvt.s32.f32 %v1250
    %v1253 = vcombine.high %v1251, %v1251
    %v1255 = vsel %vm345, %v1251, 0.0
    %v1256 = vsel %vm345, %v1253, 0.0
    %v1257 = vadd.f32 %v1255, %v1256
    %1258 = vadd.xlane.f32.xlu0 %v1257
    %v1259 = vpop.xlane.xlu0 %1258
    %vm1260 = vcmp.ge.f32.partialorder %v1259, %v704
    %v1261 = vsel %vm1260, %v1239, %v1236
    %v1262 = vsel %vm1260, %v1237, %v1239
    %v1263 = vadd.f32 %v1261, %v1262
    %v1264 = vmul.f32 %v1263, 0.5
    %v1267 = vunpack.c.l.s4 839922192
    %v1268 = vunpack.c.0.s8 %v1267
    %v1269 = vlaneseq
    %v1270 = vshrl.u32 %v1269, 7
    %v1271 = vsub.s32 %v1268, %v1270
    %v1272 = vrot.slane %v1264, %v1271
    %vm1274 = vcmp.gt.f32.partialorder %v702, %v1272
    %v1275 = vsel %vm1274, 1, 0
    %v1276 = vcvt.s32.f32 %v1275
    %v1278 = vcombine.high %v1276, %v1276
    %v1280 = vsel %vm345, %v1276, 0.0
    %v1281 = vsel %vm345, %v1278, 0.0
    %v1282 = vadd.f32 %v1280, %v1281
    %1283 = vadd.xlane.f32.xlu0 %v1282
    %v1284 = vpop.xlane.xlu0 %1283
    %vm1285 = vcmp.ge.f32.partialorder %v1284, %v704
    %v1286 = vsel %vm1285, %v1264, %v1261
    %v1287 = vsel %vm1285, %v1262, %v1264
    %v1288 = vadd.f32 %v1286, %v1287
    %v1289 = vmul.f32 %v1288, 0.5
    %v1292 = vunpack.c.l.s4 839922192
    %v1293 = vunpack.c.0.s8 %v1292
    %v1294 = vlaneseq
    %v1295 = vshrl.u32 %v1294, 7
    %v1296 = vsub.s32 %v1293, %v1295
    %v1297 = vrot.slane %v1289, %v1296
    %vm1299 = vcmp.gt.f32.partialorder %v702, %v1297
    %v1300 = vsel %vm1299, 1, 0
    %v1301 = vcvt.s32.f32 %v1300
    %v1303 = vcombine.high %v1301, %v1301
    %v1305 = vsel %vm345, %v1301, 0.0
    %v1306 = vsel %vm345, %v1303, 0.0
    %v1307 = vadd.f32 %v1305, %v1306
    %1308 = vadd.xlane.f32.xlu0 %v1307
    %v1309 = vpop.xlane.xlu0 %1308
    %vm1310 = vcmp.ge.f32.partialorder %v1309, %v704
    %v1311 = vsel %vm1310, %v1289, %v1286
    %v1312 = vsel %vm1310, %v1287, %v1289
    %v1313 = vadd.f32 %v1311, %v1312
    %v1314 = vmul.f32 %v1313, 0.5
    %v1317 = vunpack.c.l.s4 839922192
    %v1318 = vunpack.c.0.s8 %v1317
    %v1319 = vlaneseq
    %v1320 = vshrl.u32 %v1319, 7
    %v1321 = vsub.s32 %v1318, %v1320
    %v1322 = vrot.slane %v1314, %v1321
    %vm1324 = vcmp.gt.f32.partialorder %v702, %v1322
    %v1325 = vsel %vm1324, 1, 0
    %v1326 = vcvt.s32.f32 %v1325
    %v1328 = vcombine.high %v1326, %v1326
    %v1330 = vsel %vm345, %v1326, 0.0
    %v1331 = vsel %vm345, %v1328, 0.0
    %v1332 = vadd.f32 %v1330, %v1331
    %1333 = vadd.xlane.f32.xlu0 %v1332
    %v1334 = vpop.xlane.xlu0 %1333
    %vm1335 = vcmp.ge.f32.partialorder %v1334, %v704
    %v1336 = vsel %vm1335, %v1314, %v1311
    %v1337 = vsel %vm1335, %v1312, %v1314
    %v1338 = vadd.f32 %v1336, %v1337
    %v1339 = vmul.f32 %v1338, 0.5
    %v1342 = vunpack.c.l.s4 839922192
    %v1343 = vunpack.c.0.s8 %v1342
    %v1344 = vlaneseq
    %v1345 = vshrl.u32 %v1344, 7
    %v1346 = vsub.s32 %v1343, %v1345
    %v1347 = vrot.slane %v1339, %v1346
    %vm1349 = vcmp.gt.f32.partialorder %v702, %v1347
    %v1350 = vsel %vm1349, 1, 0
    %v1351 = vcvt.s32.f32 %v1350
    %v1353 = vcombine.high %v1351, %v1351
    %v1355 = vsel %vm345, %v1351, 0.0
    %v1356 = vsel %vm345, %v1353, 0.0
    %v1357 = vadd.f32 %v1355, %v1356
    %1358 = vadd.xlane.f32.xlu0 %v1357
    %v1359 = vpop.xlane.xlu0 %1358
    %vm1360 = vcmp.ge.f32.partialorder %v1359, %v704
    %v1361 = vsel %vm1360, %v1339, %v1336
    %v1362 = vsel %vm1360, %v1337, %v1339
    %v1363 = vadd.f32 %v1361, %v1362
    %v1364 = vmul.f32 %v1363, 0.5
    %v1367 = vunpack.c.l.s4 839922192
    %v1368 = vunpack.c.0.s8 %v1367
    %v1369 = vlaneseq
    %v1370 = vshrl.u32 %v1369, 7
    %v1371 = vsub.s32 %v1368, %v1370
    %v1372 = vrot.slane %v1364, %v1371
    %vm1374 = vcmp.gt.f32.partialorder %v702, %v1372
    %v1375 = vsel %vm1374, 1, 0
    %v1376 = vcvt.s32.f32 %v1375
    %v1378 = vcombine.high %v1376, %v1376
    %v1380 = vsel %vm345, %v1376, 0.0
    %v1381 = vsel %vm345, %v1378, 0.0
    %v1382 = vadd.f32 %v1380, %v1381
    %1383 = vadd.xlane.f32.xlu0 %v1382
    %v1384 = vpop.xlane.xlu0 %1383
    %vm1385 = vcmp.ge.f32.partialorder %v1384, %v704
    %v1386 = vsel %vm1385, %v1364, %v1361
    %v1387 = vsel %vm1385, %v1362, %v1364
    %v1388 = vadd.f32 %v1386, %v1387
    %v1389 = vmul.f32 %v1388, 0.5
    %v1392 = vunpack.c.l.s4 839922192
    %v1393 = vunpack.c.0.s8 %v1392
    %v1394 = vlaneseq
    %v1395 = vshrl.u32 %v1394, 7
    %v1396 = vsub.s32 %v1393, %v1395
    %v1397 = vrot.slane %v1389, %v1396
    %vm1399 = vcmp.gt.f32.partialorder %v702, %v1397
    %v1400 = vsel %vm1399, 1, 0
    %v1401 = vcvt.s32.f32 %v1400
    %v1403 = vcombine.high %v1401, %v1401
    %v1405 = vsel %vm345, %v1401, 0.0
    %v1406 = vsel %vm345, %v1403, 0.0
    %v1407 = vadd.f32 %v1405, %v1406
    %1408 = vadd.xlane.f32.xlu0 %v1407
    %v1409 = vpop.xlane.xlu0 %1408
    %vm1410 = vcmp.ge.f32.partialorder %v1409, %v704
    %v1411 = vsel %vm1410, %v1389, %v1386
    %v1412 = vsel %vm1410, %v1387, %v1389
    %v1413 = vadd.f32 %v1411, %v1412
    %v1414 = vmul.f32 %v1413, 0.5
    %v1417 = vunpack.c.l.s4 839922192
    %v1418 = vunpack.c.0.s8 %v1417
    %v1419 = vlaneseq
    %v1420 = vshrl.u32 %v1419, 7
    %v1421 = vsub.s32 %v1418, %v1420
    %v1422 = vrot.slane %v1414, %v1421
    %vm1424 = vcmp.gt.f32.partialorder %v702, %v1422
    %v1425 = vsel %vm1424, 1, 0
    %v1426 = vcvt.s32.f32 %v1425
    %v1428 = vcombine.high %v1426, %v1426
    %v1430 = vsel %vm345, %v1426, 0.0
    %v1431 = vsel %vm345, %v1428, 0.0
    %v1432 = vadd.f32 %v1430, %v1431
    %1433 = vadd.xlane.f32.xlu0 %v1432
    %v1434 = vpop.xlane.xlu0 %1433
    %vm1435 = vcmp.ge.f32.partialorder %v1434, %v704
    %v1436 = vsel %vm1435, %v1414, %v1411
    %v1437 = vsel %vm1435, %v1412, %v1414
    %v1438 = vadd.f32 %v1436, %v1437
    %v1439 = vmul.f32 %v1438, 0.5
    %v1442 = vunpack.c.l.s4 839922192
    %v1443 = vunpack.c.0.s8 %v1442
    %v1444 = vlaneseq
    %v1445 = vshrl.u32 %v1444, 7
    %v1446 = vsub.s32 %v1443, %v1445
    %v1447 = vrot.slane %v1439, %v1446
    %vm1449 = vcmp.gt.f32.partialorder %v702, %v1447
    %v1450 = vsel %vm1449, 1, 0
    %v1451 = vcvt.s32.f32 %v1450
    %v1453 = vcombine.high %v1451, %v1451
    %v1455 = vsel %vm345, %v1451, 0.0
    %v1456 = vsel %vm345, %v1453, 0.0
    %v1457 = vadd.f32 %v1455, %v1456
    %1458 = vadd.xlane.f32.xlu0 %v1457
    %v1459 = vpop.xlane.xlu0 %1458
    %vm1460 = vcmp.ge.f32.partialorder %v1459, %v704
    %v1461 = vsel %vm1460, %v1439, %v1436
    %v1462 = vsel %vm1460, %v1437, %v1439
    %v1463 = vadd.f32 %v1461, %v1462
    %v1464 = vmul.f32 %v1463, 0.5
    %v1467 = vunpack.c.l.s4 839922192
    %v1468 = vunpack.c.0.s8 %v1467
    %v1469 = vlaneseq
    %v1470 = vshrl.u32 %v1469, 7
    %v1471 = vsub.s32 %v1468, %v1470
    %v1472 = vrot.slane %v1464, %v1471
    %vm1474 = vcmp.gt.f32.partialorder %v702, %v1472
    %v1475 = vsel %vm1474, 1, 0
    %v1476 = vcvt.s32.f32 %v1475
    %v1478 = vcombine.high %v1476, %v1476
    %v1480 = vsel %vm345, %v1476, 0.0
    %v1481 = vsel %vm345, %v1478, 0.0
    %v1482 = vadd.f32 %v1480, %v1481
    %1483 = vadd.xlane.f32.xlu0 %v1482
    %v1484 = vpop.xlane.xlu0 %1483
    %vm1485 = vcmp.ge.f32.partialorder %v1484, %v704
    %v1486 = vsel %vm1485, %v1464, %v1461
    %v1487 = vsel %vm1485, %v1462, %v1464
    %v1488 = vadd.f32 %v1486, %v1487
    %v1489 = vmul.f32 %v1488, 0.5
    %v1492 = vunpack.c.l.s4 839922192
    %v1493 = vunpack.c.0.s8 %v1492
    %v1494 = vlaneseq
    %v1495 = vshrl.u32 %v1494, 7
    %v1496 = vsub.s32 %v1493, %v1495
    %v1497 = vrot.slane %v1489, %v1496
    %vm1499 = vcmp.gt.f32.partialorder %v702, %v1497
    %v1500 = vsel %vm1499, 1, 0
    %v1501 = vcvt.s32.f32 %v1500
    %v1503 = vcombine.high %v1501, %v1501
    %v1505 = vsel %vm345, %v1501, 0.0
    %v1506 = vsel %vm345, %v1503, 0.0
    %v1507 = vadd.f32 %v1505, %v1506
    %1508 = vadd.xlane.f32.xlu0 %v1507
    %v1509 = vpop.xlane.xlu0 %1508
    %vm1510 = vcmp.ge.f32.partialorder %v1509, %v704
    %v1511 = vsel %vm1510, %v1487, %v1489
    %v1514 = vunpack.c.l.s4 839922192
    %v1515 = vunpack.c.0.s8 %v1514
    %v1516 = vlaneseq
    %v1517 = vshrl.u32 %v1516, 7
    %v1518 = vsub.s32 %v1515, %v1517
    %v1519 = vrot.slane %v1511, %v1518
    %vm1521 = vcmp.le.f32.partialorder %v702, %v1519
    %v1522 = vsel %vm1521, %v702, -inf
    %v1524 = vcombine.high %v1522, %v1522
    %v1526 = vsel %vm345, %v1522, -inf
    %v1527 = vsel %vm345, %v1524, -inf
    %v1528 = vmax.f32 %v1526, %v1527
    %1529 = vmax.xlane.f32.xlu0 %v1528
    %v1530 = vpop.xlane.xlu0 %1529
    %v1533 = vunpack.c.l.s4 839922192
    %v1534 = vunpack.c.0.s8 %v1533
    %v1535 = vlaneseq
    %v1536 = vshrl.u32 %v1535, 7
    %v1537 = vsub.s32 %v1534, %v1536
    %v1538 = vrot.slane %v1530, %v1537
    %vm1540 = vcmp.gt.f32.partialorder %v702, %v1538
    %v1541 = vsel %vm1540, 1, 0
    %v1542 = vcvt.s32.f32 %v1541
    %v1544 = vcombine.high %v1542, %v1542
    %v1546 = vsel %vm345, %v1542, 0.0
    %v1547 = vsel %vm345, %v1544, 0.0
    %v1548 = vadd.f32 %v1546, %v1547
    %1549 = vadd.xlane.f32.xlu0 %v1548
    %v1550 = vpop.xlane.xlu0 %1549
    %v1551 = vmul.f32 %v702, %v1542
    %v1553 = vcombine.high %v1551, %v1551
    %v1555 = vsel %vm345, %v1551, 0.0
    %v1556 = vsel %vm345, %v1553, 0.0
    %v1557 = vadd.f32 %v1555, %v1556
    %1558 = vadd.xlane.f32.xlu0 %v1557
    %v1559 = vpop.xlane.xlu0 %1558
    %v1560 = vsub.f32 %v704, %v1550
    %v1561 = vmul.f32 %v1560, %v1530
    %v1562 = vadd.f32 %v1559, %v1561
    %v1563 = vrot.slane %v341, 1
    %v1564 = vrot.slane %v343, 1
    %v1565 = vrot.slane %v341, 2
    %v1566 = vrot.slane %v343, 2
    %v1567 = vrot.slane %v341, 3
    %v1568 = vrot.slane %v343, 3
    %v1576 = vmul.f32 %v670, %v341
    %v1577 = vmul.f32 %v671, %v343
    %v1578 = vmul.f32 %v672, %v1563
    %v1579 = vmul.f32 %v673, %v1564
    %v1580 = vmul.f32 %v674, %v1565
    %v1581 = vmul.f32 %v675, %v1566
    %v1582 = vmul.f32 %v676, %v1567
    %v1583 = vmul.f32 %v677, %v1568
    %v1592 = vrot.slane %v1578, 7
    %v1593 = vsel %vm364, %v1592, %v1576
    %v1594 = vrot.slane %v1580, 6
    %v1595 = vsel %vm369, %v1594, %v1593
    %v1596 = vrot.slane %v1582, 5
    %v1597 = vsel %vm374, %v1596, %v1595
    %v1598 = vrot.slane %v1579, 7
    %v1599 = vsel %vm364, %v1598, %v1577
    %v1600 = vrot.slane %v1581, 6
    %v1601 = vsel %vm369, %v1600, %v1599
    %v1602 = vrot.slane %v1583, 5
    %v1603 = vsel %vm374, %v1602, %v1601
    %v1606 = vsel %vm345, %v1597, 0.0
    %v1607 = vsel %vm345, %v1603, 0.0
    %v1608 = vadd.f32 %v1606, %v1607
    %1609 = vadd.xlane.f32.xlu0 %v1608
    %v1610 = vpop.xlane.xlu0 %1609
    %v1611 = vadd.f32 %v1610, %v1562
    %v1612 = vadd.f32 %v387, %v1611
    %vm1613 = vcmp.gt.f32.partialorder %v350, 0.0
    %v1614 = vsel %vm1613, 1, 0
    %v1615 = vcvt.s32.f32 %v1614
    %v1616 = vmul.f32 %v1612, %v1615
    %v1617 = vmax.f32 %v350, 1e-06
    %v1618 = vrcp.pop %v1617
    %v1619 = vmul.f32 %v1616, %v1618
    %1620 = vst [vmem:[#allocation10] sm:$0xf] %v1619
    // Predicated region
    $region38: #{tpu_custom_call.1} parent=1 // pred_check
      _
    $region39: #{tpu_custom_call.1} parent=1 // pred_check_branch
      %1622 = sbr.rel (0) target = $region41
    $region40: #{tpu_custom_call.1} parent=1 // pred_region
      %s1624 = ssub.s32 64, 64
      %1625 = vsyncadd [#allocation4], %s1624
      %s1627 = sshll.u32 [#allocation10], 4
      %s1628 = int_to_ptr.vmem [resolvable:$true] %s1627
      %1630 = dma.vmem_to_hbm [thread:$0]  %s1628, 64, %s5, [#allocation4]
    $region41: #{tpu_custom_call.1} parent=1 // pred_fallthru
      _
    // Predicated region
    $region42: #{tpu_custom_call.1} parent=1 // pred_check
      _
    $region43: #{tpu_custom_call.1} parent=1 // pred_check_branch
      %1632 = sbr.rel (0) target = $region45
    $region44: #{tpu_custom_call.1} parent=1 // pred_region
      %1633 = dma.done [#allocation4], 64
    $region45: #{tpu_custom_call.1} parent=1 // pred_fallthru
      _
    %1634 = vsyncpa [#allocation3], 1
    %1635 = vsyncpa [#allocation6], 1
    %1636 = vsyncpa [#allocation9], 1
    %1637 = vsyncpa [#allocation4], 1

</llo_original>
